<compile_context>
chip_gen: v7x
topology: tpu7x:2x2x1
jax: 0.10.0
libtpu: 0.0.40
codegen_flags: <defaults>
</compile_context>

<pallas_src>
import functools
import math

import jax
import jax.numpy as jnp
from jax import lax
from jax.experimental import pallas as pl
from jax.experimental.pallas import tpu as pltpu


def _mha_kernel(x_ref, wk_ref, bk_ref, wq_ref, bq_ref, wv_ref, bv_ref,
                o_ref, *, num_heads):
    f32 = jnp.float32
    cdt = x_ref.dtype                        # compute dtype for MXU operands
    x = x_ref[...]                           # (S, F)
    S, F = x.shape
    E = F // num_heads
    inv_sqrt_d = 1.0 / math.sqrt(E)

    # All-head projections: one (S,F)@(F,F) matmul each, f32 accumulation.
    k = jnp.dot(x, wk_ref[...], preferred_element_type=f32) + bk_ref[...].astype(f32)
    q = jnp.dot(x, wq_ref[...], preferred_element_type=f32) + bq_ref[...].astype(f32)
    v = jnp.dot(x, wv_ref[...], preferred_element_type=f32) + bv_ref[...].astype(f32)
    q = q * inv_sqrt_d                       # fold the score scale into q once

    # Static unroll over heads (H is small; E << 128 underfills the MXU per
    # head either way).  No transposes, no concatenate: write each head's
    # output slab directly into the output block.
    # TODO(synk): for large S switch to a flash-style online softmax over key
    # tiles; for F < 128 pad the lane axis in the wrapper for unmasked stores.
    for h in range(num_heads):
        sl = slice(h * E, (h + 1) * E)
        kh = k[:, sl].astype(cdt)            # (S, E)
        qh = q[:, sl].astype(cdt)            # (S, E)
        vh = v[:, sl].astype(cdt)            # (S, E)
        # scores[s, t] = k_s . q_t  (reference computes k @ q^T); contract the
        # E axis of both operands — no transpose materialized.
        scores = lax.dot_general(kh, qh, (((1,), (1,)), ((), ())),
                                 preferred_element_type=f32)       # (S, S)
        scores = scores - jnp.max(scores, axis=-1, keepdims=True)
        e = jnp.exp(scores)
        denom = jnp.sum(e, axis=-1, keepdims=True)                 # (S, 1)
        # Deferred normalization: scale the (S, E) output, not the (S, S) probs.
        attn_h = jnp.dot(e.astype(cdt), vh, preferred_element_type=f32)
        attn_h = attn_h * pl.reciprocal(denom, approx=False)
        o_ref[:, sl] = attn_h.astype(o_ref.dtype)


def multi_head_attention(x, params, num_heads, *, compute_dtype=None):
    """x: (B, S, F). params hold per-head weights concatenated to (F, F)."""
    B, S, F = x.shape
    assert F % num_heads == 0
    dtype = jnp.dtype(compute_dtype) if compute_dtype is not None else x.dtype
    xc = x.astype(dtype)
    wk, wq, wv = (params[n].astype(dtype) for n in ("wk", "wq", "wv"))
    bk, bq, bv = (params[n].astype(dtype) for n in ("bk", "bq", "bv"))

    kernel = functools.partial(_mha_kernel, num_heads=num_heads)

    per_batch = pl.BlockSpec((None, S, F), lambda b: (b, 0, 0))   # squeeze B
    mat_spec = pl.BlockSpec((F, F), lambda b: (0, 0))             # resident
    vec_spec = pl.BlockSpec((1, F), lambda b: (0, 0))             # resident

    # Explicit VMEM budget: resident weights/biases + double-buffered (S,F)
    # in/out blocks + f32 intermediates (k, q, v + one head's score tiles).
    itm = jnp.dtype(dtype).itemsize
    E = F // num_heads
    est = (3 * F * F * itm + 3 * F * itm
           + 2 * 2 * S * F * max(itm, 4)
           + (3 * S * F + 2 * S * S + S * E + S) * 4)
    vmem_limit = int(min(64 * 2**20, max(32 * 2**20, 2 * est)))

    return pl.pallas_call(
        kernel,
        out_shape=jax.ShapeDtypeStruct((B, S, F), jnp.float32),
        grid_spec=pltpu.PrefetchScalarGridSpec(
            num_scalar_prefetch=0,
            grid=(B,),
            in_specs=[per_batch,
                      mat_spec, vec_spec,    # Wk, bk
                      mat_spec, vec_spec,    # Wq, bq
                      mat_spec, vec_spec],   # Wv, bv
            out_specs=per_batch,
        ),
        compiler_params=pltpu.CompilerParams(
            dimension_semantics=("parallel",),
            vmem_limit_bytes=vmem_limit),
    )(xc, wk, bk, wq, bq, wv, bv)


# ---------------------- pure-JAX reference (for checking) -------------------
def reference(x, p, num_heads):
    """Matches the PyTorch MultiHeadAttention forward (scores = k @ q^T)."""
    F = x.shape[-1]
    E = F // num_heads
    k = x @ p["wk"] + p["bk"]
    q = x @ p["wq"] + p["bq"]
    v = x @ p["wv"] + p["bv"]
    outs = []
    for h in range(num_heads):
        sl = slice(h * E, (h + 1) * E)
        kh, qh, vh = k[..., sl], q[..., sl], v[..., sl]
        scores = jnp.einsum("bse,bte->bst", kh, qh) / math.sqrt(E)
        sm = jax.nn.softmax(scores, axis=-1)
        outs.append(jnp.einsum("bst,bte->bse", sm, vh))
    return jnp.concatenate(outs, axis=-1)


def make_params(key, F):
    ks = jax.random.split(key, 6)
    s = 1.0 / math.sqrt(F)
    return {
        "wk": jax.random.normal(ks[0], (F, F), jnp.float32) * s,
        "bk": jax.random.normal(ks[1], (1, F), jnp.float32) * 0.1,
        "wq": jax.random.normal(ks[2], (F, F), jnp.float32) * s,
        "bq": jax.random.normal(ks[3], (1, F), jnp.float32) * 0.1,
        "wv": jax.random.normal(ks[4], (F, F), jnp.float32) * s,
        "bv": jax.random.normal(ks[5], (1, F), jnp.float32) * 0.1,
    }


if __name__ == "__main__":
    B, S, F, H = 2, 8, 32, 4   # batch, seq, feat_dim, num_heads
    key = jax.random.PRNGKey(0)
    kx, kp = jax.random.split(key)
    x = jax.random.normal(kx, (B, S, F), jnp.float32)
    params = make_params(kp, F)

    ref = reference(x, params, H)

    # f32 path: strict check against the pure-JAX reference.
    out = jax.block_until_ready(multi_head_attention(x, params, H))
    assert out.shape == (B, S, F)
    err = float(jnp.max(jnp.abs(out - ref)))
    assert jnp.allclose(out, ref, atol=1e-4, rtol=1e-4), err

    # bf16 compute path (v6e/v7x MXU-native, f32 accumulation): loose check.
    out_bf = jax.block_until_ready(
        multi_head_attention(x, params, H, compute_dtype=jnp.bfloat16))
    err_bf = float(jnp.max(jnp.abs(out_bf - ref)))
    assert err_bf < 0.25, err_bf

    print("KERNEL_OK")
</pallas_src>

<mosaic_0001>
module attributes {stable_mosaic.version = 11 : i64} {
  func.func @_mha_kernel(%arg0: i32, %arg1: memref<1x8x32xf32, #tpu.memory_space<vmem>>, %arg2: memref<32x32xf32, #tpu.memory_space<vmem>>, %arg3: memref<1x32xf32, #tpu.memory_space<vmem>>, %arg4: memref<32x32xf32, #tpu.memory_space<vmem>>, %arg5: memref<1x32xf32, #tpu.memory_space<vmem>>, %arg6: memref<32x32xf32, #tpu.memory_space<vmem>>, %arg7: memref<1x32xf32, #tpu.memory_space<vmem>>, %arg8: memref<1x8x32xf32, #tpu.memory_space<vmem>>) attributes {dimension_semantics = [#tpu.dimension_semantics<parallel>], iteration_bounds = array<i64: 2>, scalar_prefetch = 0 : i64, scratch_operands = 0 : i64, tpu.core_type = #tpu.core_type<tc>, window_params = [{transform_indices = @transform_0, window_bounds = array<i64: 1, 8, 32>}, {pipeline_mode = #tpu.pipeline_mode<synchronous>, transform_indices = @transform_1, window_bounds = array<i64: 32, 32>}, {pipeline_mode = #tpu.pipeline_mode<synchronous>, transform_indices = @transform_2, window_bounds = array<i64: 1, 32>}, {pipeline_mode = #tpu.pipeline_mode<synchronous>, transform_indices = @transform_3, window_bounds = array<i64: 32, 32>}, {pipeline_mode = #tpu.pipeline_mode<synchronous>, transform_indices = @transform_4, window_bounds = array<i64: 1, 32>}, {pipeline_mode = #tpu.pipeline_mode<synchronous>, transform_indices = @transform_5, window_bounds = array<i64: 32, 32>}, {pipeline_mode = #tpu.pipeline_mode<synchronous>, transform_indices = @transform_6, window_bounds = array<i64: 1, 32>}, {transform_indices = @transform_7, window_bounds = array<i64: 1, 8, 32>}]} {
    %c0 = arith.constant 0 : index
    %c0_0 = arith.constant 0 : index
    %c0_1 = arith.constant 0 : index
    %0 = vector.load %arg1[%c0, %c0_0, %c0_1] : memref<1x8x32xf32, #tpu.memory_space<vmem>>, vector<1x8x32xf32>
    %1 = vector.shape_cast %0 : vector<1x8x32xf32> to vector<8x32xf32>
    %c0_2 = arith.constant 0 : index
    %c0_3 = arith.constant 0 : index
    %2 = vector.load %arg2[%c0_2, %c0_3] : memref<32x32xf32, #tpu.memory_space<vmem>>, vector<32x32xf32>
    %cst = arith.constant dense<0.000000e+00> : vector<8x32xf32>
    %3 = tpu.matmul %1, %2, %cst {dimension_numbers = #tpu.dot_dimension_numbers<[1], [0], [0], [1], [0, 0, 1, 1], [], []>} : vector<8x32xf32>, vector<32x32xf32>, vector<8x32xf32> -> vector<8x32xf32>
    %c0_4 = arith.constant 0 : index
    %c0_5 = arith.constant 0 : index
    %4 = vector.load %arg3[%c0_4, %c0_5] : memref<1x32xf32, #tpu.memory_space<vmem>>, vector<1x32xf32>
    %5 = vector.broadcast %4 : vector<1x32xf32> to vector<8x32xf32>
    %6 = arith.addf %3, %5 : vector<8x32xf32>
    %c0_6 = arith.constant 0 : index
    %c0_7 = arith.constant 0 : index
    %7 = vector.load %arg4[%c0_6, %c0_7] : memref<32x32xf32, #tpu.memory_space<vmem>>, vector<32x32xf32>
    %cst_8 = arith.constant dense<0.000000e+00> : vector<8x32xf32>
    %8 = tpu.matmul %1, %7, %cst_8 {dimension_numbers = #tpu.dot_dimension_numbers<[1], [0], [0], [1], [0, 0, 1, 1], [], []>} : vector<8x32xf32>, vector<32x32xf32>, vector<8x32xf32> -> vector<8x32xf32>
    %c0_9 = arith.constant 0 : index
    %c0_10 = arith.constant 0 : index
    %9 = vector.load %arg5[%c0_9, %c0_10] : memref<1x32xf32, #tpu.memory_space<vmem>>, vector<1x32xf32>
    %10 = vector.broadcast %9 : vector<1x32xf32> to vector<8x32xf32>
    %11 = arith.addf %8, %10 : vector<8x32xf32>
    %c0_11 = arith.constant 0 : index
    %c0_12 = arith.constant 0 : index
    %12 = vector.load %arg6[%c0_11, %c0_12] : memref<32x32xf32, #tpu.memory_space<vmem>>, vector<32x32xf32>
    %cst_13 = arith.constant dense<0.000000e+00> : vector<8x32xf32>
    %13 = tpu.matmul %1, %12, %cst_13 {dimension_numbers = #tpu.dot_dimension_numbers<[1], [0], [0], [1], [0, 0, 1, 1], [], []>} : vector<8x32xf32>, vector<32x32xf32>, vector<8x32xf32> -> vector<8x32xf32>
    %c0_14 = arith.constant 0 : index
    %c0_15 = arith.constant 0 : index
    %14 = vector.load %arg7[%c0_14, %c0_15] : memref<1x32xf32, #tpu.memory_space<vmem>>, vector<1x32xf32>
    %15 = vector.broadcast %14 : vector<1x32xf32> to vector<8x32xf32>
    %16 = arith.addf %13, %15 : vector<8x32xf32>
    %cst_16 = arith.constant 0.353553385 : f32
    %17 = vector.broadcast %cst_16 : f32 to vector<8x32xf32>
    %18 = arith.mulf %11, %17 : vector<8x32xf32>
    %19 = vector.extract_strided_slice %6 {offsets = [0, 0], sizes = [8, 8], strides = [1, 1]} : vector<8x32xf32> to vector<8x8xf32>
    %20 = vector.extract_strided_slice %18 {offsets = [0, 0], sizes = [8, 8], strides = [1, 1]} : vector<8x32xf32> to vector<8x8xf32>
    %21 = vector.extract_strided_slice %16 {offsets = [0, 0], sizes = [8, 8], strides = [1, 1]} : vector<8x32xf32> to vector<8x8xf32>
    %cst_17 = arith.constant dense<0.000000e+00> : vector<8x8xf32>
    %22 = tpu.matmul %19, %20, %cst_17 {dimension_numbers = #tpu.dot_dimension_numbers<[1], [1], [0], [0], [0, 0, 1, 0], [], []>} : vector<8x8xf32>, vector<8x8xf32>, vector<8x8xf32> -> vector<8x8xf32>
    %cst_18 = arith.constant dense<0xFF800000> : vector<8xf32>
    %23 = vector.multi_reduction <maximumf>, %22, %cst_18 [1] : vector<8x8xf32> to vector<8xf32>
    %24 = vector.shape_cast %23 : vector<8xf32> to vector<8x1xf32>
    %25 = vector.broadcast %24 : vector<8x1xf32> to vector<8x8xf32>
    %26 = arith.subf %22, %25 : vector<8x8xf32>
    %27 = math.exp %26 : vector<8x8xf32>
    %cst_19 = arith.constant dense<0.000000e+00> : vector<8xf32>
    %28 = vector.multi_reduction <add>, %27, %cst_19 [1] : vector<8x8xf32> to vector<8xf32>
    %29 = vector.shape_cast %28 : vector<8xf32> to vector<8x1xf32>
    %cst_20 = arith.constant dense<0.000000e+00> : vector<8x8xf32>
    %30 = tpu.matmul %27, %21, %cst_20 {dimension_numbers = #tpu.dot_dimension_numbers<[1], [0], [0], [1], [0, 0, 1, 1], [], []>} : vector<8x8xf32>, vector<8x8xf32>, vector<8x8xf32> -> vector<8x8xf32>
    %31 = tpu.reciprocal %29 : vector<8x1xf32> -> vector<8x1xf32>
    %32 = vector.broadcast %31 : vector<8x1xf32> to vector<8x8xf32>
    %33 = arith.mulf %30, %32 : vector<8x8xf32>
    %c0_21 = arith.constant 0 : index
    %c0_22 = arith.constant 0 : index
    %c0_23 = arith.constant 0 : index
    %34 = vector.load %arg8[%c0_21, %c0_22, %c0_23] : memref<1x8x32xf32, #tpu.memory_space<vmem>>, vector<1x8x8xf32>
    %35 = vector.shape_cast %34 : vector<1x8x8xf32> to vector<8x8xf32>
    %36 = vector.shape_cast %33 : vector<8x8xf32> to vector<1x8x8xf32>
    tpu.vector_store %arg8[%c0_21, %c0_22, %c0_23], %36 {strides = array<i32>} : memref<1x8x32xf32, #tpu.memory_space<vmem>>, vector<1x8x8xf32>,
    %37 = vector.extract_strided_slice %6 {offsets = [0, 8], sizes = [8, 8], strides = [1, 1]} : vector<8x32xf32> to vector<8x8xf32>
    %38 = vector.extract_strided_slice %18 {offsets = [0, 8], sizes = [8, 8], strides = [1, 1]} : vector<8x32xf32> to vector<8x8xf32>
    %39 = vector.extract_strided_slice %16 {offsets = [0, 8], sizes = [8, 8], strides = [1, 1]} : vector<8x32xf32> to vector<8x8xf32>
    %cst_24 = arith.constant dense<0.000000e+00> : vector<8x8xf32>
    %40 = tpu.matmul %37, %38, %cst_24 {dimension_numbers = #tpu.dot_dimension_numbers<[1], [1], [0], [0], [0, 0, 1, 0], [], []>} : vector<8x8xf32>, vector<8x8xf32>, vector<8x8xf32> -> vector<8x8xf32>
    %cst_25 = arith.constant dense<0xFF800000> : vector<8xf32>
    %41 = vector.multi_reduction <maximumf>, %40, %cst_25 [1] : vector<8x8xf32> to vector<8xf32>
    %42 = vector.shape_cast %41 : vector<8xf32> to vector<8x1xf32>
    %43 = vector.broadcast %42 : vector<8x1xf32> to vector<8x8xf32>
    %44 = arith.subf %40, %43 : vector<8x8xf32>
    %45 = math.exp %44 : vector<8x8xf32>
    %cst_26 = arith.constant dense<0.000000e+00> : vector<8xf32>
    %46 = vector.multi_reduction <add>, %45, %cst_26 [1] : vector<8x8xf32> to vector<8xf32>
    %47 = vector.shape_cast %46 : vector<8xf32> to vector<8x1xf32>
    %cst_27 = arith.constant dense<0.000000e+00> : vector<8x8xf32>
    %48 = tpu.matmul %45, %39, %cst_27 {dimension_numbers = #tpu.dot_dimension_numbers<[1], [0], [0], [1], [0, 0, 1, 1], [], []>} : vector<8x8xf32>, vector<8x8xf32>, vector<8x8xf32> -> vector<8x8xf32>
    %49 = tpu.reciprocal %47 : vector<8x1xf32> -> vector<8x1xf32>
    %50 = vector.broadcast %49 : vector<8x1xf32> to vector<8x8xf32>
    %51 = arith.mulf %48, %50 : vector<8x8xf32>
    %c0_28 = arith.constant 0 : index
    %c0_29 = arith.constant 0 : index
    %c8 = arith.constant 8 : index
    %52 = vector.load %arg8[%c0_28, %c0_29, %c8] : memref<1x8x32xf32, #tpu.memory_space<vmem>>, vector<1x8x8xf32>
    %53 = vector.shape_cast %52 : vector<1x8x8xf32> to vector<8x8xf32>
    %54 = vector.shape_cast %51 : vector<8x8xf32> to vector<1x8x8xf32>
    tpu.vector_store %arg8[%c0_28, %c0_29, %c8], %54 {strides = array<i32>} : memref<1x8x32xf32, #tpu.memory_space<vmem>>, vector<1x8x8xf32>,
    %55 = vector.extract_strided_slice %6 {offsets = [0, 16], sizes = [8, 8], strides = [1, 1]} : vector<8x32xf32> to vector<8x8xf32>
    %56 = vector.extract_strided_slice %18 {offsets = [0, 16], sizes = [8, 8], strides = [1, 1]} : vector<8x32xf32> to vector<8x8xf32>
    %57 = vector.extract_strided_slice %16 {offsets = [0, 16], sizes = [8, 8], strides = [1, 1]} : vector<8x32xf32> to vector<8x8xf32>
    %cst_30 = arith.constant dense<0.000000e+00> : vector<8x8xf32>
    %58 = tpu.matmul %55, %56, %cst_30 {dimension_numbers = #tpu.dot_dimension_numbers<[1], [1], [0], [0], [0, 0, 1, 0], [], []>} : vector<8x8xf32>, vector<8x8xf32>, vector<8x8xf32> -> vector<8x8xf32>
    %cst_31 = arith.constant dense<0xFF800000> : vector<8xf32>
    %59 = vector.multi_reduction <maximumf>, %58, %cst_31 [1] : vector<8x8xf32> to vector<8xf32>
    %60 = vector.shape_cast %59 : vector<8xf32> to vector<8x1xf32>
    %61 = vector.broadcast %60 : vector<8x1xf32> to vector<8x8xf32>
    %62 = arith.subf %58, %61 : vector<8x8xf32>
    %63 = math.exp %62 : vector<8x8xf32>
    %cst_32 = arith.constant dense<0.000000e+00> : vector<8xf32>
    %64 = vector.multi_reduction <add>, %63, %cst_32 [1] : vector<8x8xf32> to vector<8xf32>
    %65 = vector.shape_cast %64 : vector<8xf32> to vector<8x1xf32>
    %cst_33 = arith.constant dense<0.000000e+00> : vector<8x8xf32>
    %66 = tpu.matmul %63, %57, %cst_33 {dimension_numbers = #tpu.dot_dimension_numbers<[1], [0], [0], [1], [0, 0, 1, 1], [], []>} : vector<8x8xf32>, vector<8x8xf32>, vector<8x8xf32> -> vector<8x8xf32>
    %67 = tpu.reciprocal %65 : vector<8x1xf32> -> vector<8x1xf32>
    %68 = vector.broadcast %67 : vector<8x1xf32> to vector<8x8xf32>
    %69 = arith.mulf %66, %68 : vector<8x8xf32>
    %c0_34 = arith.constant 0 : index
    %c0_35 = arith.constant 0 : index
    %c16 = arith.constant 16 : index
    %70 = vector.load %arg8[%c0_34, %c0_35, %c16] : memref<1x8x32xf32, #tpu.memory_space<vmem>>, vector<1x8x8xf32>
    %71 = vector.shape_cast %70 : vector<1x8x8xf32> to vector<8x8xf32>
    %72 = vector.shape_cast %69 : vector<8x8xf32> to vector<1x8x8xf32>
    tpu.vector_store %arg8[%c0_34, %c0_35, %c16], %72 {strides = array<i32>} : memref<1x8x32xf32, #tpu.memory_space<vmem>>, vector<1x8x8xf32>,
    %73 = vector.extract_strided_slice %6 {offsets = [0, 24], sizes = [8, 8], strides = [1, 1]} : vector<8x32xf32> to vector<8x8xf32>
    %74 = vector.extract_strided_slice %18 {offsets = [0, 24], sizes = [8, 8], strides = [1, 1]} : vector<8x32xf32> to vector<8x8xf32>
    %75 = vector.extract_strided_slice %16 {offsets = [0, 24], sizes = [8, 8], strides = [1, 1]} : vector<8x32xf32> to vector<8x8xf32>
    %cst_36 = arith.constant dense<0.000000e+00> : vector<8x8xf32>
    %76 = tpu.matmul %73, %74, %cst_36 {dimension_numbers = #tpu.dot_dimension_numbers<[1], [1], [0], [0], [0, 0, 1, 0], [], []>} : vector<8x8xf32>, vector<8x8xf32>, vector<8x8xf32> -> vector<8x8xf32>
    %cst_37 = arith.constant dense<0xFF800000> : vector<8xf32>
    %77 = vector.multi_reduction <maximumf>, %76, %cst_37 [1] : vector<8x8xf32> to vector<8xf32>
    %78 = vector.shape_cast %77 : vector<8xf32> to vector<8x1xf32>
    %79 = vector.broadcast %78 : vector<8x1xf32> to vector<8x8xf32>
    %80 = arith.subf %76, %79 : vector<8x8xf32>
    %81 = math.exp %80 : vector<8x8xf32>
    %cst_38 = arith.constant dense<0.000000e+00> : vector<8xf32>
    %82 = vector.multi_reduction <add>, %81, %cst_38 [1] : vector<8x8xf32> to vector<8xf32>
    %83 = vector.shape_cast %82 : vector<8xf32> to vector<8x1xf32>
    %cst_39 = arith.constant dense<0.000000e+00> : vector<8x8xf32>
    %84 = tpu.matmul %81, %75, %cst_39 {dimension_numbers = #tpu.dot_dimension_numbers<[1], [0], [0], [1], [0, 0, 1, 1], [], []>} : vector<8x8xf32>, vector<8x8xf32>, vector<8x8xf32> -> vector<8x8xf32>
    %85 = tpu.reciprocal %83 : vector<8x1xf32> -> vector<8x1xf32>
    %86 = vector.broadcast %85 : vector<8x1xf32> to vector<8x8xf32>
    %87 = arith.mulf %84, %86 : vector<8x8xf32>
    %c0_40 = arith.constant 0 : index
    %c0_41 = arith.constant 0 : index
    %c24 = arith.constant 24 : index
    %88 = vector.load %arg8[%c0_40, %c0_41, %c24] : memref<1x8x32xf32, #tpu.memory_space<vmem>>, vector<1x8x8xf32>
    %89 = vector.shape_cast %88 : vector<1x8x8xf32> to vector<8x8xf32>
    %90 = vector.shape_cast %87 : vector<8x8xf32> to vector<1x8x8xf32>
    tpu.vector_store %arg8[%c0_40, %c0_41, %c24], %90 {strides = array<i32>} : memref<1x8x32xf32, #tpu.memory_space<vmem>>, vector<1x8x8xf32>,
    return
  }
  func.func @transform_0(%arg0: i32) -> (i32, i32, i32) {
    %c0_i32 = arith.constant 0 : i32
    %c0_i32_0 = arith.constant 0 : i32
    %c0_i32_1 = arith.constant 0 : i32
    return %arg0, %c0_i32, %c0_i32_0 : i32, i32, i32
  }
  func.func @transform_1(%arg0: i32) -> (i32, i32) {
    %c0_i32 = arith.constant 0 : i32
    %c0_i32_0 = arith.constant 0 : i32
    %c0_i32_1 = arith.constant 0 : i32
    return %c0_i32, %c0_i32_0 : i32, i32
  }
  func.func @transform_2(%arg0: i32) -> (i32, i32) {
    %c0_i32 = arith.constant 0 : i32
    %c0_i32_0 = arith.constant 0 : i32
    %c0_i32_1 = arith.constant 0 : i32
    return %c0_i32, %c0_i32_0 : i32, i32
  }
  func.func @transform_3(%arg0: i32) -> (i32, i32) {
    %c0_i32 = arith.constant 0 : i32
    %c0_i32_0 = arith.constant 0 : i32
    %c0_i32_1 = arith.constant 0 : i32
    return %c0_i32, %c0_i32_0 : i32, i32
  }
  func.func @transform_4(%arg0: i32) -> (i32, i32) {
    %c0_i32 = arith.constant 0 : i32
    %c0_i32_0 = arith.constant 0 : i32
    %c0_i32_1 = arith.constant 0 : i32
    return %c0_i32, %c0_i32_0 : i32, i32
  }
  func.func @transform_5(%arg0: i32) -> (i32, i32) {
    %c0_i32 = arith.constant 0 : i32
    %c0_i32_0 = arith.constant 0 : i32
    %c0_i32_1 = arith.constant 0 : i32
    return %c0_i32, %c0_i32_0 : i32, i32
  }
  func.func @transform_6(%arg0: i32) -> (i32, i32) {
    %c0_i32 = arith.constant 0 : i32
    %c0_i32_0 = arith.constant 0 : i32
    %c0_i32_1 = arith.constant 0 : i32
    return %c0_i32, %c0_i32_0 : i32, i32
  }
  func.func @transform_7(%arg0: i32) -> (i32, i32, i32) {
    %c0_i32 = arith.constant 0 : i32
    %c0_i32_0 = arith.constant 0 : i32
    %c0_i32_1 = arith.constant 0 : i32
    return %arg0, %c0_i32, %c0_i32_0 : i32, i32, i32
  }
}

</mosaic_0001>

<llo_original>
// kernel: tpu_custom_call.1
$region0: #{tpu_custom_call.1}
  #allocation0 [shape = 'u32[]', space=smem, size = 0x4, offset = 0x4, fixed_abs, tag = 'smem constant byte address 0x4 - core index']
  #allocation1 [shape = 'u32[144,128]{1,0:T(1,128)}', space=vmem, size = 0x12000, scoped, tag = 'internal scratch']
  %s0 = inlined_call_operand.hbm [shape: f32[2,8,32], index: 0, kind: input, shape index: {}]
  %s1 = inlined_call_operand.hbm [shape: f32[32,32], index: 1, kind: input, shape index: {}]
  %s2 = inlined_call_operand.vmem [shape: f32[1,32], index: 2, kind: input, shape index: {}]
  %s3 = inlined_call_operand.hbm [shape: f32[32,32], index: 3, kind: input, shape index: {}]
  %s4 = inlined_call_operand.vmem [shape: f32[1,32], index: 4, kind: input, shape index: {}]
  %s5 = inlined_call_operand.hbm [shape: f32[32,32], index: 5, kind: input, shape index: {}]
  %s6 = inlined_call_operand.vmem [shape: f32[1,32], index: 6, kind: input, shape index: {}]
  %s7 = inlined_call_operand.hbm [shape: f32[2,8,32], index: 7, kind: output, shape index: {}]
  %s8 = sld [smem:[#allocation0]]
  $region77: #{tpu_custom_call.1} parent=0
    _
  %s10 = ssub.s32 1, %s8
  %s11 = scalar_select 0, %s10, %s8
  $region1: #{tpu_custom_call.1} parent=0
    #allocation2 [shape = 'u8[8192]{0}', space=vmem, size = 0x2000, scoped, tag = 'input window, operand 0']
    #allocation3 [shape = 's32[2]{0}', space=sflag, size = 0x8, scoped, tag = 'scoped memory for tpu_custom_call.1']
    #allocation4 [shape = 's32[2]{0}', space=sflag, size = 0x8, scoped, tag = 'scoped memory for tpu_custom_call.1']
    #allocation5 [shape = 'u8[16384]{0}', space=vmem, size = 0x4000, scoped, tag = 'input window, operand 1, single buffered']
    #allocation6 [shape = 's32[1]{0}', space=sflag, size = 0x4, scoped, tag = 'scoped memory for tpu_custom_call.1']
    #allocation7 [shape = 'u8[16384]{0}', space=vmem, size = 0x4000, scoped, tag = 'input window, operand 3, single buffered']
    #allocation8 [shape = 'u8[16384]{0}', space=vmem, size = 0x4000, scoped, tag = 'input window, operand 5, single buffered']
    #allocation9 [shape = 's32[1]{0}', space=sflag, size = 0x4, scoped, tag = 'scoped memory for tpu_custom_call.1']
    #allocation10 [shape = 'u8[8192]{0}', space=vmem, size = 0x2000, scoped, tag = 'output window, operand 0']
    %12 = vsyncpa [#allocation3], 0
    %s13 = scalar_lea.sflag [#allocation3], 1
    %14 = vsyncpa %s13, 0
    %15 = vsyncpa [#allocation6], 0
    %16 = vsyncpa [#allocation9], 0
    %17 = vsyncpa [#allocation4], 0
    %s18 = scalar_lea.sflag [#allocation4], 1
    %19 = vsyncpa %s18, 0
    loop: start=0, step=1, limit=4
    $region2: #{tpu_custom_call.1} parent=1 // loop_pre_header
      _
    $region3: #{tpu_custom_call.1} parent=1 // loop_header
      %s21 = sphi 0, %s25
      %p22 = scmp.ge.s32.totalorder %s21, 4
      %s31 = sphi 0, %s33
      %s34 = sphi 0, %s31
      %s35 = sphi 0, %s34
      %s51 = sphi 0, %s35
      %s55 = sphi 0, %s55
      %s57 = sphi 0, %s55
      %s58 = sphi 0, %s57
      %s72 = sphi 0, %s58
      %s76 = sphi 0, %s76
      %s78 = sphi 0, %s76
      %s79 = sphi 0, %s78
      %s93 = sphi 0, %s79
      %s97 = sphi 0, %s97
      %s99 = sphi 0, %s97
      %s100 = sphi 0, %s99
      %s114 = sphi 0, %s100
      %s118 = sphi 0, %s118
      %s120 = sphi 0, %s118
      %s121 = sphi 0, %s120
      %s135 = sphi 0, %s121
      %s139 = sphi 0, %s139
      %s141 = sphi 0, %s139
      %s142 = sphi 0, %s141
      %s156 = sphi 0, %s142
      %s160 = sphi 0, %s160
      %s162 = sphi 0, %s160
      %s163 = sphi 0, %s162
      %s177 = sphi 0, %s163
      %s183 = sphi 0, %s185
      %s186 = sphi 0, %s183
      %s187 = sphi 0, %s186
      %s203 = sphi 0, %s187
    $region4: #{tpu_custom_call.1} parent=1 // loop_header_branch
      %24 = sbr.rel (%p22) target = $region8
    $region5: #{tpu_custom_call.1} parent=1 // loop_body
      %s26 = ssub.s32 %s21, 1
      %s27 = ssub.s32 %s21, 2
      %s28 = sadd.s32 %s21, 1
      %s29 = ssub.s32 %s21, %s28
      %p30 = scmp.eq.s32.totalorder %s29, 0
      %s32 = sadd.s32 %s31, 1
      %s33 = scalar_select %p30, %s31, %s32
      %p36 = pneg %p30
      %p37 = scmp.eq.s32.totalorder %s21, 1
      %p38 = por %p36, %p37
      %p39 = scmp.ne.s32.totalorder %s31, %s34
      %p40 = scmp.eq.s32.totalorder %s21, 0
      %p41 = por %p39, %p40
      %p42 = scmp.ne.s32.totalorder %s31, %s34
      %p43 = scmp.eq.s32.totalorder %s26, 1
      %p44 = por %p42, %p43
      %p45 = scmp.ne.s32.totalorder %s34, %s35
      %p46 = scmp.eq.s32.totalorder %s26, 0
      %p47 = por %p45, %p46
      %p48 = scmp.ne.s32.totalorder %s34, %s35
      %p49 = scmp.eq.s32.totalorder %s27, 1
      %p50 = por %p48, %p49
      %p52 = scmp.ne.s32.totalorder %s35, %s51
      %p53 = scmp.eq.s32.totalorder %s27, 0
      %p54 = por %p52, %p53
      %s56 = sadd.s32 %s55, 1
      %p59 = scmp.eq.s32.totalorder %s21, 1
      %p60 = scmp.ne.s32.totalorder %s55, %s57
      %p61 = scmp.eq.s32.totalorder %s21, 0
      %p62 = por %p60, %p61
      %p63 = scmp.ne.s32.totalorder %s55, %s57
      %p64 = scmp.eq.s32.totalorder %s26, 1
      %p65 = por %p63, %p64
      %p66 = scmp.ne.s32.totalorder %s57, %s58
      %p67 = scmp.eq.s32.totalorder %s26, 0
      %p68 = por %p66, %p67
      %p69 = scmp.ne.s32.totalorder %s57, %s58
      %p70 = scmp.eq.s32.totalorder %s27, 1
      %p71 = por %p69, %p70
      %p73 = scmp.ne.s32.totalorder %s58, %s72
      %p74 = scmp.eq.s32.totalorder %s27, 0
      %p75 = por %p73, %p74
      %s77 = sadd.s32 %s76, 1
      %p80 = scmp.eq.s32.totalorder %s21, 1
      %p81 = scmp.ne.s32.totalorder %s76, %s78
      %p82 = scmp.eq.s32.totalorder %s21, 0
      %p83 = por %p81, %p82
      %p84 = scmp.ne.s32.totalorder %s76, %s78
      %p85 = scmp.eq.s32.totalorder %s26, 1
      %p86 = por %p84, %p85
      %p87 = scmp.ne.s32.totalorder %s78, %s79
      %p88 = scmp.eq.s32.totalorder %s26, 0
      %p89 = por %p87, %p88
      %p90 = scmp.ne.s32.totalorder %s78, %s79
      %p91 = scmp.eq.s32.totalorder %s27, 1
      %p92 = por %p90, %p91
      %p94 = scmp.ne.s32.totalorder %s79, %s93
      %p95 = scmp.eq.s32.totalorder %s27, 0
      %p96 = por %p94, %p95
      %s98 = sadd.s32 %s97, 1
      %p101 = scmp.eq.s32.totalorder %s21, 1
      %p102 = scmp.ne.s32.totalorder %s97, %s99
      %p103 = scmp.eq.s32.totalorder %s21, 0
      %p104 = por %p102, %p103
      %p105 = scmp.ne.s32.totalorder %s97, %s99
      %p106 = scmp.eq.s32.totalorder %s26, 1
      %p107 = por %p105, %p106
      %p108 = scmp.ne.s32.totalorder %s99, %s100
      %p109 = scmp.eq.s32.totalorder %s26, 0
      %p110 = por %p108, %p109
      %p111 = scmp.ne.s32.totalorder %s99, %s100
      %p112 = scmp.eq.s32.totalorder %s27, 1
      %p113 = por %p111, %p112
      %p115 = scmp.ne.s32.totalorder %s100, %s114
      %p116 = scmp.eq.s32.totalorder %s27, 0
      %p117 = por %p115, %p116
      %s119 = sadd.s32 %s118, 1
      %p122 = scmp.eq.s32.totalorder %s21, 1
      %p123 = scmp.ne.s32.totalorder %s118, %s120
      %p124 = scmp.eq.s32.totalorder %s21, 0
      %p125 = por %p123, %p124
      %p126 = scmp.ne.s32.totalorder %s118, %s120
      %p127 = scmp.eq.s32.totalorder %s26, 1
      %p128 = por %p126, %p127
      %p129 = scmp.ne.s32.totalorder %s120, %s121
      %p130 = scmp.eq.s32.totalorder %s26, 0
      %p131 = por %p129, %p130
      %p132 = scmp.ne.s32.totalorder %s120, %s121
      %p133 = scmp.eq.s32.totalorder %s27, 1
      %p134 = por %p132, %p133
      %p136 = scmp.ne.s32.totalorder %s121, %s135
      %p137 = scmp.eq.s32.totalorder %s27, 0
      %p138 = por %p136, %p137
      %s140 = sadd.s32 %s139, 1
      %p143 = scmp.eq.s32.totalorder %s21, 1
      %p144 = scmp.ne.s32.totalorder %s139, %s141
      %p145 = scmp.eq.s32.totalorder %s21, 0
      %p146 = por %p144, %p145
      %p147 = scmp.ne.s32.totalorder %s139, %s141
      %p148 = scmp.eq.s32.totalorder %s26, 1
      %p149 = por %p147, %p148
      %p150 = scmp.ne.s32.totalorder %s141, %s142
      %p151 = scmp.eq.s32.totalorder %s26, 0
      %p152 = por %p150, %p151
      %p153 = scmp.ne.s32.totalorder %s141, %s142
      %p154 = scmp.eq.s32.totalorder %s27, 1
      %p155 = por %p153, %p154
      %p157 = scmp.ne.s32.totalorder %s142, %s156
      %p158 = scmp.eq.s32.totalorder %s27, 0
      %p159 = por %p157, %p158
      %s161 = sadd.s32 %s160, 1
      %p164 = scmp.eq.s32.totalorder %s21, 1
      %p165 = scmp.ne.s32.totalorder %s160, %s162
      %p166 = scmp.eq.s32.totalorder %s21, 0
      %p167 = por %p165, %p166
      %p168 = scmp.ne.s32.totalorder %s160, %s162
      %p169 = scmp.eq.s32.totalorder %s26, 1
      %p170 = por %p168, %p169
      %p171 = scmp.ne.s32.totalorder %s162, %s163
      %p172 = scmp.eq.s32.totalorder %s26, 0
      %p173 = por %p171, %p172
      %p174 = scmp.ne.s32.totalorder %s162, %s163
      %p175 = scmp.eq.s32.totalorder %s27, 1
      %p176 = por %p174, %p175
      %p178 = scmp.ne.s32.totalorder %s163, %s177
      %p179 = scmp.eq.s32.totalorder %s27, 0
      %p180 = por %p178, %p179
      %s181 = ssub.s32 %s21, %s28
      %p182 = scmp.eq.s32.totalorder %s181, 0
      %s184 = sadd.s32 %s183, 1
      %s185 = scalar_select %p182, %s183, %s184
      %p188 = pneg %p182
      %p189 = scmp.eq.s32.totalorder %s21, 1
      %p190 = por %p188, %p189
      %p191 = scmp.ne.s32.totalorder %s183, %s186
      %p192 = scmp.eq.s32.totalorder %s21, 0
      %p193 = por %p191, %p192
      %p194 = scmp.ne.s32.totalorder %s183, %s186
      %p195 = scmp.eq.s32.totalorder %s26, 1
      %p196 = por %p194, %p195
      %p197 = scmp.ne.s32.totalorder %s186, %s187
      %p198 = scmp.eq.s32.totalorder %s26, 0
      %p199 = por %p197, %p198
      %p200 = scmp.ne.s32.totalorder %s186, %s187
      %p201 = scmp.eq.s32.totalorder %s27, 1
      %p202 = por %p200, %p201
      %p204 = scmp.ne.s32.totalorder %s187, %s203
      %p205 = scmp.eq.s32.totalorder %s27, 0
      %p206 = por %p204, %p205
      %p207 = scmp.le.s32.totalorder 1, %s21
      %p208 = scmp.lt.s32.totalorder %s21, 3
      %p209 = pnand %p207, %p208
      %p210 = pneg %p209
      // Predicated region
      $region9: #{tpu_custom_call.1} parent=5 // pred_check
        _
      $region10: #{tpu_custom_call.1} parent=5 // pred_check_branch
        %212 = sbr.rel (%p209) target = $region12
      $region11: #{tpu_custom_call.1} parent=5 // pred_region
        %s213 = ssub.s32 %s21, 1
        // Predicated region
        $region13: #{tpu_custom_call.1} parent=11 // pred_check
          %p214 = pneg %p68
        $region14: #{tpu_custom_call.1} parent=11 // pred_check_branch
          %216 = sbr.rel (%p214) target = $region16
        $region15: #{tpu_custom_call.1} parent=11 // pred_region
          %s218 = ssub.s32 512, 512
          %219 = vsyncadd [#allocation6], %s218
          %s220 = sshll.u32 [#allocation5], 4
          %s221 = int_to_ptr.vmem [resolvable:$true] %s220
          %226 = dma.hbm_to_vmem [thread:$0]  %s1, 512, %s221, [#allocation6], 128, 128, 8
        $region16: #{tpu_custom_call.1} parent=11 // pred_fallthru
          _
        // Predicated region
        $region17: #{tpu_custom_call.1} parent=11 // pred_check
          %p227 = pneg %p89
        $region18: #{tpu_custom_call.1} parent=11 // pred_check_branch
          %229 = sbr.rel (%p227) target = $region20
        $region19: #{tpu_custom_call.1} parent=11 // pred_region
          _
        $region20: #{tpu_custom_call.1} parent=11 // pred_fallthru
          _
        // Predicated region
        $region21: #{tpu_custom_call.1} parent=11 // pred_check
          %p230 = pneg %p110
        $region22: #{tpu_custom_call.1} parent=11 // pred_check_branch
          %232 = sbr.rel (%p230) target = $region24
        $region23: #{tpu_custom_call.1} parent=11 // pred_region
          %s234 = ssub.s32 512, 512
          %235 = vsyncadd [#allocation6], %s234
          %s236 = sshll.u32 [#allocation7], 4
          %s237 = int_to_ptr.vmem [resolvable:$true] %s236
          %242 = dma.hbm_to_vmem [thread:$0]  %s3, 512, %s237, [#allocation6], 128, 128, 8
        $region24: #{tpu_custom_call.1} parent=11 // pred_fallthru
          _
        // Predicated region
        $region25: #{tpu_custom_call.1} parent=11 // pred_check
          %p243 = pneg %p131
        $region26: #{tpu_custom_call.1} parent=11 // pred_check_branch
          %245 = sbr.rel (%p243) target = $region28
        $region27: #{tpu_custom_call.1} parent=11 // pred_region
          _
        $region28: #{tpu_custom_call.1} parent=11 // pred_fallthru
          _
        // Predicated region
        $region29: #{tpu_custom_call.1} parent=11 // pred_check
          %p246 = pneg %p152
        $region30: #{tpu_custom_call.1} parent=11 // pred_check_branch
          %248 = sbr.rel (%p246) target = $region32
        $region31: #{tpu_custom_call.1} parent=11 // pred_region
          %s250 = ssub.s32 512, 512
          %251 = vsyncadd [#allocation9], %s250
          %s252 = sshll.u32 [#allocation8], 4
          %s253 = int_to_ptr.vmem [resolvable:$true] %s252
          %258 = dma.hbm_to_vmem [thread:$0]  %s5, 512, %s253, [#allocation9], 128, 128, 8
        $region32: #{tpu_custom_call.1} parent=11 // pred_fallthru
          _
        // Predicated region
        $region33: #{tpu_custom_call.1} parent=11 // pred_check
          %p259 = pneg %p173
        $region34: #{tpu_custom_call.1} parent=11 // pred_check_branch
          %261 = sbr.rel (%p259) target = $region36
        $region35: #{tpu_custom_call.1} parent=11 // pred_region
          _
        $region36: #{tpu_custom_call.1} parent=11 // pred_fallthru
          _
      $region12: #{tpu_custom_call.1} parent=5 // pred_fallthru
        _
      %p262 = scmp.lt.s32.totalorder %s21, 2
      // Predicated region
      $region37: #{tpu_custom_call.1} parent=5 // pred_check
        %p263 = pneg %p262
      $region38: #{tpu_custom_call.1} parent=5 // pred_check_branch
        %265 = sbr.rel (%p263) target = $region40
      $region39: #{tpu_custom_call.1} parent=5 // pred_region
        // Predicated region
        $region41: #{tpu_custom_call.1} parent=39 // pred_check
          %p266 = pneg %p41
        $region42: #{tpu_custom_call.1} parent=39 // pred_check_branch
          %268 = sbr.rel (%p266) target = $region44
        $region43: #{tpu_custom_call.1} parent=39 // pred_region
          %s269 = sand.u32 %s31, 1
          %s270 = scalar_lea.sflag [#allocation3], %s269
          %s271 = sand.u32 %s31, 1
          %s272 = smul.addr %s271, 8
          %s273 = scalar_lea.vmem [#allocation2], %s272
          %s275 = ssub.s32 128, 128
          %276 = vsyncadd %s270, %s275
          %s277 = smul.addr %s21, 128
          %s278 = scalar_lea.hbm %s0, %s277
          %s280 = sshll.u32 %s273, 4
          %s281 = int_to_ptr.vmem [resolvable:$true] %s280
          %283 = dma.hbm_to_vmem [thread:$0]  %s278, 128, %s281, %s270
        $region44: #{tpu_custom_call.1} parent=39 // pred_fallthru
          _
      $region40: #{tpu_custom_call.1} parent=5 // pred_fallthru
        _
      %p284 = scmp.le.s32.totalorder 1, %s21
      %p285 = scmp.lt.s32.totalorder %s21, 3
      %p286 = pnand %p284, %p285
      %p287 = pneg %p286
      // Predicated region
      $region45: #{tpu_custom_call.1} parent=5 // pred_check
        _
      $region46: #{tpu_custom_call.1} parent=5 // pred_check_branch
        %289 = sbr.rel (%p286) target = $region48
      $region47: #{tpu_custom_call.1} parent=5 // pred_region
        %s290 = ssub.s32 %s21, 1
        %s291 = sand.u32 %s34, 1
        %s292 = scalar_lea.sflag [#allocation3], %s291
        %s293 = sand.u32 %s34, 1
        %s294 = smul.addr %s293, 8
        %s295 = scalar_lea.vmem [#allocation2], %s294
        // Predicated region
        $region49: #{tpu_custom_call.1} parent=47 // pred_check
          %p296 = pneg %p47
        $region50: #{tpu_custom_call.1} parent=47 // pred_check_branch
          %298 = sbr.rel (%p296) target = $region52
        $region51: #{tpu_custom_call.1} parent=47 // pred_region
          %299 = dma.done %s292, 128
        $region52: #{tpu_custom_call.1} parent=47 // pred_fallthru
          _
        // Predicated region
        $region53: #{tpu_custom_call.1} parent=47 // pred_check
          %p300 = pneg %p68
        $region54: #{tpu_custom_call.1} parent=47 // pred_check_branch
          %302 = sbr.rel (%p300) target = $region56
        $region55: #{tpu_custom_call.1} parent=47 // pred_region
          %303 = dma.done [#allocation6], 512
        $region56: #{tpu_custom_call.1} parent=47 // pred_fallthru
          _
        // Predicated region
        $region57: #{tpu_custom_call.1} parent=47 // pred_check
          %p304 = pneg %p110
        $region58: #{tpu_custom_call.1} parent=47 // pred_check_branch
          %306 = sbr.rel (%p304) target = $region60
        $region59: #{tpu_custom_call.1} parent=47 // pred_region
          %307 = dma.done [#allocation6], 512
        $region60: #{tpu_custom_call.1} parent=47 // pred_fallthru
          _
        // Predicated region
        $region61: #{tpu_custom_call.1} parent=47 // pred_check
          %p308 = pneg %p152
        $region62: #{tpu_custom_call.1} parent=47 // pred_check_branch
          %310 = sbr.rel (%p308) target = $region64
        $region63: #{tpu_custom_call.1} parent=47 // pred_region
          %311 = dma.done [#allocation9], 512
        $region64: #{tpu_custom_call.1} parent=47 // pred_fallthru
          _
        %s312 = sand.u32 %s34, 1
        %s313 = scalar_lea.sflag [#allocation3], %s312
        %s314 = sand.u32 %s34, 1
        %s315 = smul.addr %s314, 8
        %s316 = scalar_lea.vmem [#allocation2], %s315
        %p317 = pneg %p47
        %p318 = pneg %p44
        %p319 = pneg %p68
        %p320 = pneg %p65
        %p321 = pneg %p89
        %p322 = pneg %p86
        %p323 = pneg %p110
        %p324 = pneg %p107
        %p325 = pneg %p131
        %p326 = pneg %p128
        %p327 = pneg %p152
        %p328 = pneg %p149
        %p329 = pneg %p173
        %p330 = pneg %p170
        %p331 = pneg %p199
        %p332 = pneg %p196
        %s333 = sand.u32 %s186, 1
        %s334 = scalar_lea.sflag [#allocation4], %s333
        %s335 = sand.u32 %s186, 1
        %s336 = smul.addr %s335, 8
        %s337 = scalar_lea.vmem [#allocation10], %s336
        %v338 = vld [vmem:[%s295] sm:$0xff]
        %v339 = vld [vmem:[#allocation5] sm:$0xff]
        %v340 = vld [vmem:[#allocation5 + $0x8] sm:$0xff]
        %v341 = vld [vmem:[#allocation5 + $0x10] sm:$0xff]
        %v342 = vld [vmem:[#allocation5 + $0x18] sm:$0xff]
        %v343 = vld [vmem:[%s2] sm:$0x1]
        %v345 = vlaneseq
        %v346 = vshrl.u32 %v345, 7
        %v347 = vsub.s32 0, %v346
        %v348 = vrot.slane %v343, %v347
        %vm350 = vcmask 261120
        %v352 = vsel %vm350, %v338, 0
        %354 = vmatprep.subr.mxu0 0.0
        %355 = vmatpush1.msra.mxu0 %v339
        %356 = vmatprep.subr.mxu0 0.0
        %357 = vmatpush1.msra.mxu0 %v340
        %358 = vmatprep.subr.mxu0 0.0
        %359 = vmatpush1.msra.mxu0 %v341
        %360 = vmatprep.subr.mxu0 0.0
        %361 = vmatpush1.msra.mxu0 %v342
        %362 = vmatprep.subr.mxu0 0.0
        %363 = vmatpush1.msra.mxu0 0.0
        %364 = vmatprep.subr.mxu0 0.0
        %365 = vmatpush1.msra.mxu0 0.0
        %366 = vmatprep.subr.mxu0 0.0
        %367 = vmatpush1.msra.mxu0 0.0
        %368 = vmatprep.subr.mxu0 0.0
        %369 = vmatpush1.msra.mxu0 0.0
        %370 = vmatprep.subr.mxu0 0.0
        %371 = vmatpush1.msra.mxu0 0.0
        %372 = vmatprep.subr.mxu0 0.0
        %373 = vmatpush1.msra.mxu0 0.0
        %374 = vmatprep.subr.mxu0 0.0
        %375 = vmatpush1.msra.mxu0 0.0
        %376 = vmatprep.subr.mxu0 0.0
        %377 = vmatpush1.msra.mxu0 0.0
        %378 = vmatprep.subr.mxu0 0.0
        %379 = vmatpush1.msra.mxu0 0.0
        %380 = vmatprep.subr.mxu0 0.0
        %381 = vmatpush1.msra.mxu0 0.0
        %382 = vmatprep.subr.mxu0 0.0
        %383 = vmatpush1.msra.mxu0 0.0
        %384 = vmatprep.subr.mxu0 0.0
        %385 = vmatpush1.msra.mxu0 0.0
        %386 = vmatprep.subr.mxu0 0.0
        %387 = vmatpush1.msra.mxu0 0.0
        %388 = vmatprep.subr.mxu0 0.0
        %389 = vmatpush1.msra.mxu0 0.0
        %390 = vmatprep.subr.mxu0 0.0
        %391 = vmatpush1.msra.mxu0 0.0
        %392 = vmatprep.subr.mxu0 0.0
        %393 = vmatpush1.msra.mxu0 0.0
        %394 = vmatprep.subr.mxu0 0.0
        %395 = vmatpush1.msra.mxu0 0.0
        %396 = vmatprep.subr.mxu0 0.0
        %397 = vmatpush1.msra.mxu0 0.0
        %398 = vmatprep.subr.mxu0 0.0
        %399 = vmatpush1.msra.mxu0 0.0
        %400 = vmatprep.subr.mxu0 0.0
        %401 = vmatpush1.msra.mxu0 0.0
        %402 = vmatprep.subr.mxu0 0.0
        %403 = vmatpush1.msra.mxu0 0.0
        %404 = vmatprep.subr.mxu0 0.0
        %405 = vmatpush1.msra.mxu0 0.0
        %406 = vmatprep.subr.mxu0 0.0
        %407 = vmatpush1.msra.mxu0 0.0
        %408 = vmatprep.subr.mxu0 0.0
        %409 = vmatpush1.msra.mxu0 0.0
        %410 = vmatprep.subr.mxu0 0.0
        %411 = vmatpush1.msra.mxu0 0.0
        %412 = vmatprep.subr.mxu0 0.0
        %413 = vmatpush1.msra.mxu0 0.0
        %414 = vmatprep.subr.mxu0 0.0
        %415 = vmatpush1.msra.mxu0 0.0
        %416 = vmatprep.subr.mxu0 0.0
        %417 = vmatpush1.msra.mxu0 0.0
        %418 = vmatprep.mubr.f32.mxu0 0.0
        %419 = vmatmul.mubr.f32.gmra.mrb[0].mxu0 %v352
        %v420 = vpop.f32.mrb[0].mxu0
        %v421 = vadd.f32 %v348, %v420
        %v422 = vpop.f32.mrb[0].mxu0
        %423 = vdwg.mxu0
        %v424 = vld [vmem:[#allocation7] sm:$0xff]
        %v425 = vld [vmem:[#allocation7 + $0x8] sm:$0xff]
        %v426 = vld [vmem:[#allocation7 + $0x10] sm:$0xff]
        %v427 = vld [vmem:[#allocation7 + $0x18] sm:$0xff]
        %v428 = vld [vmem:[%s4] sm:$0x1]
        %v430 = vlaneseq
        %v431 = vshrl.u32 %v430, 7
        %v432 = vsub.s32 0, %v431
        %v433 = vrot.slane %v428, %v432
        %435 = vmatprep.subr.mxu0 0.0
        %436 = vmatpush1.msra.mxu0 %v424
        %437 = vmatprep.subr.mxu0 0.0
        %438 = vmatpush1.msra.mxu0 %v425
        %439 = vmatprep.subr.mxu0 0.0
        %440 = vmatpush1.msra.mxu0 %v426
        %441 = vmatprep.subr.mxu0 0.0
        %442 = vmatpush1.msra.mxu0 %v427
        %443 = vmatprep.subr.mxu0 0.0
        %444 = vmatpush1.msra.mxu0 0.0
        %445 = vmatprep.subr.mxu0 0.0
        %446 = vmatpush1.msra.mxu0 0.0
        %447 = vmatprep.subr.mxu0 0.0
        %448 = vmatpush1.msra.mxu0 0.0
        %449 = vmatprep.subr.mxu0 0.0
        %450 = vmatpush1.msra.mxu0 0.0
        %451 = vmatprep.subr.mxu0 0.0
        %452 = vmatpush1.msra.mxu0 0.0
        %453 = vmatprep.subr.mxu0 0.0
        %454 = vmatpush1.msra.mxu0 0.0
        %455 = vmatprep.subr.mxu0 0.0
        %456 = vmatpush1.msra.mxu0 0.0
        %457 = vmatprep.subr.mxu0 0.0
        %458 = vmatpush1.msra.mxu0 0.0
        %459 = vmatprep.subr.mxu0 0.0
        %460 = vmatpush1.msra.mxu0 0.0
        %461 = vmatprep.subr.mxu0 0.0
        %462 = vmatpush1.msra.mxu0 0.0
        %463 = vmatprep.subr.mxu0 0.0
        %464 = vmatpush1.msra.mxu0 0.0
        %465 = vmatprep.subr.mxu0 0.0
        %466 = vmatpush1.msra.mxu0 0.0
        %467 = vmatprep.subr.mxu0 0.0
        %468 = vmatpush1.msra.mxu0 0.0
        %469 = vmatprep.subr.mxu0 0.0
        %470 = vmatpush1.msra.mxu0 0.0
        %471 = vmatprep.subr.mxu0 0.0
        %472 = vmatpush1.msra.mxu0 0.0
        %473 = vmatprep.subr.mxu0 0.0
        %474 = vmatpush1.msra.mxu0 0.0
        %475 = vmatprep.subr.mxu0 0.0
        %476 = vmatpush1.msra.mxu0 0.0
        %477 = vmatprep.subr.mxu0 0.0
        %478 = vmatpush1.msra.mxu0 0.0
        %479 = vmatprep.subr.mxu0 0.0
        %480 = vmatpush1.msra.mxu0 0.0
        %481 = vmatprep.subr.mxu0 0.0
        %482 = vmatpush1.msra.mxu0 0.0
        %483 = vmatprep.subr.mxu0 0.0
        %484 = vmatpush1.msra.mxu0 0.0
        %485 = vmatprep.subr.mxu0 0.0
        %486 = vmatpush1.msra.mxu0 0.0
        %487 = vmatprep.subr.mxu0 0.0
        %488 = vmatpush1.msra.mxu0 0.0
        %489 = vmatprep.subr.mxu0 0.0
        %490 = vmatpush1.msra.mxu0 0.0
        %491 = vmatprep.subr.mxu0 0.0
        %492 = vmatpush1.msra.mxu0 0.0
        %493 = vmatprep.subr.mxu0 0.0
        %494 = vmatpush1.msra.mxu0 0.0
        %495 = vmatprep.subr.mxu0 0.0
        %496 = vmatpush1.msra.mxu0 0.0
        %497 = vmatprep.subr.mxu0 0.0
        %498 = vmatpush1.msra.mxu0 0.0
        %499 = vmatprep.mubr.f32.mxu0 0.0
        %500 = vmatmul.mubr.f32.gmra.mrb[0].mxu0 %v352
        %v501 = vpop.f32.mrb[0].mxu0
        %v502 = vadd.f32 %v433, %v501
        %v503 = vpop.f32.mrb[0].mxu0
        %504 = vdwg.mxu0
        %v505 = vld [vmem:[#allocation8] sm:$0xff]
        %v506 = vld [vmem:[#allocation8 + $0x8] sm:$0xff]
        %v507 = vld [vmem:[#allocation8 + $0x10] sm:$0xff]
        %v508 = vld [vmem:[#allocation8 + $0x18] sm:$0xff]
        %v509 = vld [vmem:[%s6] sm:$0x1]
        %v511 = vlaneseq
        %v512 = vshrl.u32 %v511, 7
        %v513 = vsub.s32 0, %v512
        %v514 = vrot.slane %v509, %v513
        %516 = vmatprep.subr.mxu0 0.0
        %517 = vmatpush1.msra.mxu0 %v505
        %518 = vmatprep.subr.mxu0 0.0
        %519 = vmatpush1.msra.mxu0 %v506
        %520 = vmatprep.subr.mxu0 0.0
        %521 = vmatpush1.msra.mxu0 %v507
        %522 = vmatprep.subr.mxu0 0.0
        %523 = vmatpush1.msra.mxu0 %v508
        %524 = vmatprep.subr.mxu0 0.0
        %525 = vmatpush1.msra.mxu0 0.0
        %526 = vmatprep.subr.mxu0 0.0
        %527 = vmatpush1.msra.mxu0 0.0
        %528 = vmatprep.subr.mxu0 0.0
        %529 = vmatpush1.msra.mxu0 0.0
        %530 = vmatprep.subr.mxu0 0.0
        %531 = vmatpush1.msra.mxu0 0.0
        %532 = vmatprep.subr.mxu0 0.0
        %533 = vmatpush1.msra.mxu0 0.0
        %534 = vmatprep.subr.mxu0 0.0
        %535 = vmatpush1.msra.mxu0 0.0
        %536 = vmatprep.subr.mxu0 0.0
        %537 = vmatpush1.msra.mxu0 0.0
        %538 = vmatprep.subr.mxu0 0.0
        %539 = vmatpush1.msra.mxu0 0.0
        %540 = vmatprep.subr.mxu0 0.0
        %541 = vmatpush1.msra.mxu0 0.0
        %542 = vmatprep.subr.mxu0 0.0
        %543 = vmatpush1.msra.mxu0 0.0
        %544 = vmatprep.subr.mxu0 0.0
        %545 = vmatpush1.msra.mxu0 0.0
        %546 = vmatprep.subr.mxu0 0.0
        %547 = vmatpush1.msra.mxu0 0.0
        %548 = vmatprep.subr.mxu0 0.0
        %549 = vmatpush1.msra.mxu0 0.0
        %550 = vmatprep.subr.mxu0 0.0
        %551 = vmatpush1.msra.mxu0 0.0
        %552 = vmatprep.subr.mxu0 0.0
        %553 = vmatpush1.msra.mxu0 0.0
        %554 = vmatprep.subr.mxu0 0.0
        %555 = vmatpush1.msra.mxu0 0.0
        %556 = vmatprep.subr.mxu0 0.0
        %557 = vmatpush1.msra.mxu0 0.0
        %558 = vmatprep.subr.mxu0 0.0
        %559 = vmatpush1.msra.mxu0 0.0
        %560 = vmatprep.subr.mxu0 0.0
        %561 = vmatpush1.msra.mxu0 0.0
        %562 = vmatprep.subr.mxu0 0.0
        %563 = vmatpush1.msra.mxu0 0.0
        %564 = vmatprep.subr.mxu0 0.0
        %565 = vmatpush1.msra.mxu0 0.0
        %566 = vmatprep.subr.mxu0 0.0
        %567 = vmatpush1.msra.mxu0 0.0
        %568 = vmatprep.subr.mxu0 0.0
        %569 = vmatpush1.msra.mxu0 0.0
        %570 = vmatprep.subr.mxu0 0.0
        %571 = vmatpush1.msra.mxu0 0.0
        %572 = vmatprep.subr.mxu0 0.0
        %573 = vmatpush1.msra.mxu0 0.0
        %574 = vmatprep.subr.mxu0 0.0
        %575 = vmatpush1.msra.mxu0 0.0
        %576 = vmatprep.subr.mxu0 0.0
        %577 = vmatpush1.msra.mxu0 0.0
        %578 = vmatprep.subr.mxu0 0.0
        %579 = vmatpush1.msra.mxu0 0.0
        %580 = vmatprep.mubr.f32.mxu0 0.0
        %581 = vmatmul.mubr.f32.gmra.mrb[0].mxu0 %v352
        %v582 = vpop.f32.mrb[0].mxu0
        %v583 = vadd.f32 %v514, %v582
        %v584 = vpop.f32.mrb[0].mxu0
        %585 = vdwg.mxu0
        %v586 = vmul.f32 %v502, 0.35355338
        %vm587 = vcmask 64512
        %v589 = vsel %vm587, %v421, 0
        %v592 = vsel %vm587, %v586, 0
        %594 = vmatprep.subr.mxu0 0.0
        %595 = vmatpush1.xpose.msra.mxu0 %v592
        %596 = vmatprep.subr.mxu0 0.0
        %597 = vmatpush1.xpose.msra.mxu0 0.0
        %598 = vmatprep.subr.mxu0 0.0
        %599 = vmatpush1.xpose.msra.mxu0 0.0
        %600 = vmatprep.subr.mxu0 0.0
        %601 = vmatpush1.xpose.msra.mxu0 0.0
        %602 = vmatprep.subr.mxu0 0.0
        %603 = vmatpush1.xpose.msra.mxu0 0.0
        %604 = vmatprep.subr.mxu0 0.0
        %605 = vmatpush1.xpose.msra.mxu0 0.0
        %606 = vmatprep.subr.mxu0 0.0
        %607 = vmatpush1.xpose.msra.mxu0 0.0
        %608 = vmatprep.subr.mxu0 0.0
        %609 = vmatpush1.xpose.msra.mxu0 0.0
        %610 = vmatprep.subr.mxu0 0.0
        %611 = vmatpush1.xpose.msra.mxu0 0.0
        %612 = vmatprep.subr.mxu0 0.0
        %613 = vmatpush1.xpose.msra.mxu0 0.0
        %614 = vmatprep.subr.mxu0 0.0
        %615 = vmatpush1.xpose.msra.mxu0 0.0
        %616 = vmatprep.subr.mxu0 0.0
        %617 = vmatpush1.xpose.msra.mxu0 0.0
        %618 = vmatprep.subr.mxu0 0.0
        %619 = vmatpush1.xpose.msra.mxu0 0.0
        %620 = vmatprep.subr.mxu0 0.0
        %621 = vmatpush1.xpose.msra.mxu0 0.0
        %622 = vmatprep.subr.mxu0 0.0
        %623 = vmatpush1.xpose.msra.mxu0 0.0
        %624 = vmatprep.subr.mxu0 0.0
        %625 = vmatpush1.xpose.msra.mxu0 0.0
        %626 = vmatprep.subr.mxu0 0.0
        %627 = vmatpush1.xpose.msra.mxu0 0.0
        %628 = vmatprep.subr.mxu0 0.0
        %629 = vmatpush1.xpose.msra.mxu0 0.0
        %630 = vmatprep.subr.mxu0 0.0
        %631 = vmatpush1.xpose.msra.mxu0 0.0
        %632 = vmatprep.subr.mxu0 0.0
        %633 = vmatpush1.xpose.msra.mxu0 0.0
        %634 = vmatprep.subr.mxu0 0.0
        %635 = vmatpush1.xpose.msra.mxu0 0.0
        %636 = vmatprep.subr.mxu0 0.0
        %637 = vmatpush1.xpose.msra.mxu0 0.0
        %638 = vmatprep.subr.mxu0 0.0
        %639 = vmatpush1.xpose.msra.mxu0 0.0
        %640 = vmatprep.subr.mxu0 0.0
        %641 = vmatpush1.xpose.msra.mxu0 0.0
        %642 = vmatprep.subr.mxu0 0.0
        %643 = vmatpush1.xpose.msra.mxu0 0.0
        %644 = vmatprep.subr.mxu0 0.0
        %645 = vmatpush1.xpose.msra.mxu0 0.0
        %646 = vmatprep.subr.mxu0 0.0
        %647 = vmatpush1.xpose.msra.mxu0 0.0
        %648 = vmatprep.subr.mxu0 0.0
        %649 = vmatpush1.xpose.msra.mxu0 0.0
        %650 = vmatprep.subr.mxu0 0.0
        %651 = vmatpush1.xpose.msra.mxu0 0.0
        %652 = vmatprep.subr.mxu0 0.0
        %653 = vmatpush1.xpose.msra.mxu0 0.0
        %654 = vmatprep.subr.mxu0 0.0
        %655 = vmatpush1.xpose.msra.mxu0 0.0
        %656 = vmatprep.subr.mxu0 0.0
        %657 = vmatpush1.xpose.msra.mxu0 0.0
        %658 = vmatprep.mubr.f32.mxu0 0.0
        %659 = vmatmul.mubr.f32.gmra.mrb[0].mxu0 %v589
        %v660 = vpop.f32.mrb[0].mxu0
        %v661 = vadd.f32 0.0, %v660
        %v662 = vpop.f32.mrb[0].mxu0
        %663 = vdwg.mxu0
        %v664 = vsel %vm587, %v661, -inf
        %665 = vmax.xlane.f32.xlu0 %v664
        %v666 = vpop.xlane.xlu0 %665
        %v667 = vsub.f32 %v661, %v666
        %v668 = vmul.f32 %v667, 1.442695
        %v669 = vpow.pop %v668
        %v670 = vsel %vm587, %v669, 0.0
        %671 = vadd.xlane.f32.xlu0 %v670
        %v672 = vpop.xlane.xlu0 %671
        %v674 = vsel %vm587, %v669, 0
        %676 = vmatprep.subr.mxu0 0.0
        %677 = vmatpush1.msra.mxu0 %v583
        %678 = vmatprep.subr.mxu0 0.0
        %679 = vmatpush1.msra.mxu0 0.0
        %680 = vmatprep.subr.mxu0 0.0
        %681 = vmatpush1.msra.mxu0 0.0
        %682 = vmatprep.subr.mxu0 0.0
        %683 = vmatpush1.msra.mxu0 0.0
        %684 = vmatprep.subr.mxu0 0.0
        %685 = vmatpush1.msra.mxu0 0.0
        %686 = vmatprep.subr.mxu0 0.0
        %687 = vmatpush1.msra.mxu0 0.0
        %688 = vmatprep.subr.mxu0 0.0
        %689 = vmatpush1.msra.mxu0 0.0
        %690 = vmatprep.subr.mxu0 0.0
        %691 = vmatpush1.msra.mxu0 0.0
        %692 = vmatprep.subr.mxu0 0.0
        %693 = vmatpush1.msra.mxu0 0.0
        %694 = vmatprep.subr.mxu0 0.0
        %695 = vmatpush1.msra.mxu0 0.0
        %696 = vmatprep.subr.mxu0 0.0
        %697 = vmatpush1.msra.mxu0 0.0
        %698 = vmatprep.subr.mxu0 0.0
        %699 = vmatpush1.msra.mxu0 0.0
        %700 = vmatprep.subr.mxu0 0.0
        %701 = vmatpush1.msra.mxu0 0.0
        %702 = vmatprep.subr.mxu0 0.0
        %703 = vmatpush1.msra.mxu0 0.0
        %704 = vmatprep.subr.mxu0 0.0
        %705 = vmatpush1.msra.mxu0 0.0
        %706 = vmatprep.subr.mxu0 0.0
        %707 = vmatpush1.msra.mxu0 0.0
        %708 = vmatprep.subr.mxu0 0.0
        %709 = vmatpush1.msra.mxu0 0.0
        %710 = vmatprep.subr.mxu0 0.0
        %711 = vmatpush1.msra.mxu0 0.0
        %712 = vmatprep.subr.mxu0 0.0
        %713 = vmatpush1.msra.mxu0 0.0
        %714 = vmatprep.subr.mxu0 0.0
        %715 = vmatpush1.msra.mxu0 0.0
        %716 = vmatprep.subr.mxu0 0.0
        %717 = vmatpush1.msra.mxu0 0.0
        %718 = vmatprep.subr.mxu0 0.0
        %719 = vmatpush1.msra.mxu0 0.0
        %720 = vmatprep.subr.mxu0 0.0
        %721 = vmatpush1.msra.mxu0 0.0
        %722 = vmatprep.subr.mxu0 0.0
        %723 = vmatpush1.msra.mxu0 0.0
        %724 = vmatprep.subr.mxu0 0.0
        %725 = vmatpush1.msra.mxu0 0.0
        %726 = vmatprep.subr.mxu0 0.0
        %727 = vmatpush1.msra.mxu0 0.0
        %728 = vmatprep.subr.mxu0 0.0
        %729 = vmatpush1.msra.mxu0 0.0
        %730 = vmatprep.subr.mxu0 0.0
        %731 = vmatpush1.msra.mxu0 0.0
        %732 = vmatprep.subr.mxu0 0.0
        %733 = vmatpush1.msra.mxu0 0.0
        %734 = vmatprep.subr.mxu0 0.0
        %735 = vmatpush1.msra.mxu0 0.0
        %736 = vmatprep.subr.mxu0 0.0
        %737 = vmatpush1.msra.mxu0 0.0
        %738 = vmatprep.subr.mxu0 0.0
        %739 = vmatpush1.msra.mxu0 0.0
        %740 = vmatprep.mubr.f32.mxu0 0.0
        %741 = vmatmul.mubr.f32.gmra.mrb[0].mxu0 %v674
        %v742 = vpop.f32.mrb[0].mxu0
        %v743 = vadd.f32 0.0, %v742
        %v744 = vpop.f32.mrb[0].mxu0
        %745 = vdwg.mxu0
        %v746 = vrcp.pop %v672
        %v747 = vmul.f32 %v743, %v746
        %748 = vst.msk [vmem:[%s337] sm:$0xff] %vm587, %v747
        %749 = vrot.lane.b32.xlu0 %v421, 120
        %v750 = vpop.permute.xlu0 %749
        %751 = vrot.lane.b32.xlu0 %v586, 120
        %v752 = vpop.permute.xlu0 %751
        %v753 = vsel %vm587, %v750, 0
        %v755 = vsel %vm587, %v752, 0
        %757 = vmatprep.subr.mxu0 0.0
        %758 = vmatpush1.xpose.msra.mxu0 %v755
        %759 = vmatprep.subr.mxu0 0.0
        %760 = vmatpush1.xpose.msra.mxu0 0.0
        %761 = vmatprep.subr.mxu0 0.0
        %762 = vmatpush1.xpose.msra.mxu0 0.0
        %763 = vmatprep.subr.mxu0 0.0
        %764 = vmatpush1.xpose.msra.mxu0 0.0
        %765 = vmatprep.subr.mxu0 0.0
        %766 = vmatpush1.xpose.msra.mxu0 0.0
        %767 = vmatprep.subr.mxu0 0.0
        %768 = vmatpush1.xpose.msra.mxu0 0.0
        %769 = vmatprep.subr.mxu0 0.0
        %770 = vmatpush1.xpose.msra.mxu0 0.0
        %771 = vmatprep.subr.mxu0 0.0
        %772 = vmatpush1.xpose.msra.mxu0 0.0
        %773 = vmatprep.subr.mxu0 0.0
        %774 = vmatpush1.xpose.msra.mxu0 0.0
        %775 = vmatprep.subr.mxu0 0.0
        %776 = vmatpush1.xpose.msra.mxu0 0.0
        %777 = vmatprep.subr.mxu0 0.0
        %778 = vmatpush1.xpose.msra.mxu0 0.0
        %779 = vmatprep.subr.mxu0 0.0
        %780 = vmatpush1.xpose.msra.mxu0 0.0
        %781 = vmatprep.subr.mxu0 0.0
        %782 = vmatpush1.xpose.msra.mxu0 0.0
        %783 = vmatprep.subr.mxu0 0.0
        %784 = vmatpush1.xpose.msra.mxu0 0.0
        %785 = vmatprep.subr.mxu0 0.0
        %786 = vmatpush1.xpose.msra.mxu0 0.0
        %787 = vmatprep.subr.mxu0 0.0
        %788 = vmatpush1.xpose.msra.mxu0 0.0
        %789 = vmatprep.subr.mxu0 0.0
        %790 = vmatpush1.xpose.msra.mxu0 0.0
        %791 = vmatprep.subr.mxu0 0.0
        %792 = vmatpush1.xpose.msra.mxu0 0.0
        %793 = vmatprep.subr.mxu0 0.0
        %794 = vmatpush1.xpose.msra.mxu0 0.0
        %795 = vmatprep.subr.mxu0 0.0
        %796 = vmatpush1.xpose.msra.mxu0 0.0
        %797 = vmatprep.subr.mxu0 0.0
        %798 = vmatpush1.xpose.msra.mxu0 0.0
        %799 = vmatprep.subr.mxu0 0.0
        %800 = vmatpush1.xpose.msra.mxu0 0.0
        %801 = vmatprep.subr.mxu0 0.0
        %802 = vmatpush1.xpose.msra.mxu0 0.0
        %803 = vmatprep.subr.mxu0 0.0
        %804 = vmatpush1.xpose.msra.mxu0 0.0
        %805 = vmatprep.subr.mxu0 0.0
        %806 = vmatpush1.xpose.msra.mxu0 0.0
        %807 = vmatprep.subr.mxu0 0.0
        %808 = vmatpush1.xpose.msra.mxu0 0.0
        %809 = vmatprep.subr.mxu0 0.0
        %810 = vmatpush1.xpose.msra.mxu0 0.0
        %811 = vmatprep.subr.mxu0 0.0
        %812 = vmatpush1.xpose.msra.mxu0 0.0
        %813 = vmatprep.subr.mxu0 0.0
        %814 = vmatpush1.xpose.msra.mxu0 0.0
        %815 = vmatprep.subr.mxu0 0.0
        %816 = vmatpush1.xpose.msra.mxu0 0.0
        %817 = vmatprep.subr.mxu0 0.0
        %818 = vmatpush1.xpose.msra.mxu0 0.0
        %819 = vmatprep.subr.mxu0 0.0
        %820 = vmatpush1.xpose.msra.mxu0 0.0
        %821 = vmatprep.mubr.f32.mxu0 0.0
        %822 = vmatmul.mubr.f32.gmra.mrb[0].mxu0 %v753
        %v823 = vpop.f32.mrb[0].mxu0
        %v824 = vadd.f32 0.0, %v823
        %v825 = vpop.f32.mrb[0].mxu0
        %826 = vdwg.mxu0
        %v827 = vsel %vm587, %v824, -inf
        %828 = vmax.xlane.f32.xlu0 %v827
        %v829 = vpop.xlane.xlu0 %828
        %v830 = vsub.f32 %v824, %v829
        %v831 = vmul.f32 %v830, 1.442695
        %v832 = vpow.pop %v831
        %v833 = vsel %vm587, %v832, 0.0
        %834 = vadd.xlane.f32.xlu0 %v833
        %v835 = vpop.xlane.xlu0 %834
        %837 = vrot.lane.b32.xlu0 %v583, 120
        %v838 = vpop.permute.xlu0 %837
        %v841 = vsel %vm587, %v832, 0
        %843 = vmatprep.subr.mxu0 0.0
        %844 = vmatpush1.msra.mxu0 %v838
        %845 = vmatprep.subr.mxu0 0.0
        %846 = vmatpush1.msra.mxu0 0.0
        %847 = vmatprep.subr.mxu0 0.0
        %848 = vmatpush1.msra.mxu0 0.0
        %849 = vmatprep.subr.mxu0 0.0
        %850 = vmatpush1.msra.mxu0 0.0
        %851 = vmatprep.subr.mxu0 0.0
        %852 = vmatpush1.msra.mxu0 0.0
        %853 = vmatprep.subr.mxu0 0.0
        %854 = vmatpush1.msra.mxu0 0.0
        %855 = vmatprep.subr.mxu0 0.0
        %856 = vmatpush1.msra.mxu0 0.0
        %857 = vmatprep.subr.mxu0 0.0
        %858 = vmatpush1.msra.mxu0 0.0
        %859 = vmatprep.subr.mxu0 0.0
        %860 = vmatpush1.msra.mxu0 0.0
        %861 = vmatprep.subr.mxu0 0.0
        %862 = vmatpush1.msra.mxu0 0.0
        %863 = vmatprep.subr.mxu0 0.0
        %864 = vmatpush1.msra.mxu0 0.0
        %865 = vmatprep.subr.mxu0 0.0
        %866 = vmatpush1.msra.mxu0 0.0
        %867 = vmatprep.subr.mxu0 0.0
        %868 = vmatpush1.msra.mxu0 0.0
        %869 = vmatprep.subr.mxu0 0.0
        %870 = vmatpush1.msra.mxu0 0.0
        %871 = vmatprep.subr.mxu0 0.0
        %872 = vmatpush1.msra.mxu0 0.0
        %873 = vmatprep.subr.mxu0 0.0
        %874 = vmatpush1.msra.mxu0 0.0
        %875 = vmatprep.subr.mxu0 0.0
        %876 = vmatpush1.msra.mxu0 0.0
        %877 = vmatprep.subr.mxu0 0.0
        %878 = vmatpush1.msra.mxu0 0.0
        %879 = vmatprep.subr.mxu0 0.0
        %880 = vmatpush1.msra.mxu0 0.0
        %881 = vmatprep.subr.mxu0 0.0
        %882 = vmatpush1.msra.mxu0 0.0
        %883 = vmatprep.subr.mxu0 0.0
        %884 = vmatpush1.msra.mxu0 0.0
        %885 = vmatprep.subr.mxu0 0.0
        %886 = vmatpush1.msra.mxu0 0.0
        %887 = vmatprep.subr.mxu0 0.0
        %888 = vmatpush1.msra.mxu0 0.0
        %889 = vmatprep.subr.mxu0 0.0
        %890 = vmatpush1.msra.mxu0 0.0
        %891 = vmatprep.subr.mxu0 0.0
        %892 = vmatpush1.msra.mxu0 0.0
        %893 = vmatprep.subr.mxu0 0.0
        %894 = vmatpush1.msra.mxu0 0.0
        %895 = vmatprep.subr.mxu0 0.0
        %896 = vmatpush1.msra.mxu0 0.0
        %897 = vmatprep.subr.mxu0 0.0
        %898 = vmatpush1.msra.mxu0 0.0
        %899 = vmatprep.subr.mxu0 0.0
        %900 = vmatpush1.msra.mxu0 0.0
        %901 = vmatprep.subr.mxu0 0.0
        %902 = vmatpush1.msra.mxu0 0.0
        %903 = vmatprep.subr.mxu0 0.0
        %904 = vmatpush1.msra.mxu0 0.0
        %905 = vmatprep.subr.mxu0 0.0
        %906 = vmatpush1.msra.mxu0 0.0
        %907 = vmatprep.mubr.f32.mxu0 0.0
        %908 = vmatmul.mubr.f32.gmra.mrb[0].mxu0 %v841
        %v909 = vpop.f32.mrb[0].mxu0
        %v910 = vadd.f32 0.0, %v909
        %v911 = vpop.f32.mrb[0].mxu0
        %912 = vdwg.mxu0
        %v913 = vrcp.pop %v835
        %v914 = vmul.f32 %v910, %v913
        %916 = vrot.lane.b32.xlu0 %v914, 8
        %v917 = vpop.permute.xlu0 %916
        %vm919 = vcmask 130112
        %920 = vst.msk [vmem:[%s337] sm:$0xff] %vm919, %v917
        %921 = vrot.lane.b32.xlu0 %v421, 112
        %v922 = vpop.permute.xlu0 %921
        %923 = vrot.lane.b32.xlu0 %v586, 112
        %v924 = vpop.permute.xlu0 %923
        %v925 = vsel %vm587, %v922, 0
        %v927 = vsel %vm587, %v924, 0
        %929 = vmatprep.subr.mxu0 0.0
        %930 = vmatpush1.xpose.msra.mxu0 %v927
        %931 = vmatprep.subr.mxu0 0.0
        %932 = vmatpush1.xpose.msra.mxu0 0.0
        %933 = vmatprep.subr.mxu0 0.0
        %934 = vmatpush1.xpose.msra.mxu0 0.0
        %935 = vmatprep.subr.mxu0 0.0
        %936 = vmatpush1.xpose.msra.mxu0 0.0
        %937 = vmatprep.subr.mxu0 0.0
        %938 = vmatpush1.xpose.msra.mxu0 0.0
        %939 = vmatprep.subr.mxu0 0.0
        %940 = vmatpush1.xpose.msra.mxu0 0.0
        %941 = vmatprep.subr.mxu0 0.0
        %942 = vmatpush1.xpose.msra.mxu0 0.0
        %943 = vmatprep.subr.mxu0 0.0
        %944 = vmatpush1.xpose.msra.mxu0 0.0
        %945 = vmatprep.subr.mxu0 0.0
        %946 = vmatpush1.xpose.msra.mxu0 0.0
        %947 = vmatprep.subr.mxu0 0.0
        %948 = vmatpush1.xpose.msra.mxu0 0.0
        %949 = vmatprep.subr.mxu0 0.0
        %950 = vmatpush1.xpose.msra.mxu0 0.0
        %951 = vmatprep.subr.mxu0 0.0
        %952 = vmatpush1.xpose.msra.mxu0 0.0
        %953 = vmatprep.subr.mxu0 0.0
        %954 = vmatpush1.xpose.msra.mxu0 0.0
        %955 = vmatprep.subr.mxu0 0.0
        %956 = vmatpush1.xpose.msra.mxu0 0.0
        %957 = vmatprep.subr.mxu0 0.0
        %958 = vmatpush1.xpose.msra.mxu0 0.0
        %959 = vmatprep.subr.mxu0 0.0
        %960 = vmatpush1.xpose.msra.mxu0 0.0
        %961 = vmatprep.subr.mxu0 0.0
        %962 = vmatpush1.xpose.msra.mxu0 0.0
        %963 = vmatprep.subr.mxu0 0.0
        %964 = vmatpush1.xpose.msra.mxu0 0.0
        %965 = vmatprep.subr.mxu0 0.0
        %966 = vmatpush1.xpose.msra.mxu0 0.0
        %967 = vmatprep.subr.mxu0 0.0
        %968 = vmatpush1.xpose.msra.mxu0 0.0
        %969 = vmatprep.subr.mxu0 0.0
        %970 = vmatpush1.xpose.msra.mxu0 0.0
        %971 = vmatprep.subr.mxu0 0.0
        %972 = vmatpush1.xpose.msra.mxu0 0.0
        %973 = vmatprep.subr.mxu0 0.0
        %974 = vmatpush1.xpose.msra.mxu0 0.0
        %975 = vmatprep.subr.mxu0 0.0
        %976 = vmatpush1.xpose.msra.mxu0 0.0
        %977 = vmatprep.subr.mxu0 0.0
        %978 = vmatpush1.xpose.msra.mxu0 0.0
        %979 = vmatprep.subr.mxu0 0.0
        %980 = vmatpush1.xpose.msra.mxu0 0.0
        %981 = vmatprep.subr.mxu0 0.0
        %982 = vmatpush1.xpose.msra.mxu0 0.0
        %983 = vmatprep.subr.mxu0 0.0
        %984 = vmatpush1.xpose.msra.mxu0 0.0
        %985 = vmatprep.subr.mxu0 0.0
        %986 = vmatpush1.xpose.msra.mxu0 0.0
        %987 = vmatprep.subr.mxu0 0.0
        %988 = vmatpush1.xpose.msra.mxu0 0.0
        %989 = vmatprep.subr.mxu0 0.0
        %990 = vmatpush1.xpose.msra.mxu0 0.0
        %991 = vmatprep.subr.mxu0 0.0
        %992 = vmatpush1.xpose.msra.mxu0 0.0
        %993 = vmatprep.mubr.f32.mxu0 0.0
        %994 = vmatmul.mubr.f32.gmra.mrb[0].mxu0 %v925
        %v995 = vpop.f32.mrb[0].mxu0
        %v996 = vadd.f32 0.0, %v995
        %v997 = vpop.f32.mrb[0].mxu0
        %998 = vdwg.mxu0
        %v999 = vsel %vm587, %v996, -inf
        %1000 = vmax.xlane.f32.xlu0 %v999
        %v1001 = vpop.xlane.xlu0 %1000
        %v1002 = vsub.f32 %v996, %v1001
        %v1003 = vmul.f32 %v1002, 1.442695
        %v1004 = vpow.pop %v1003
        %v1005 = vsel %vm587, %v1004, 0.0
        %1006 = vadd.xlane.f32.xlu0 %v1005
        %v1007 = vpop.xlane.xlu0 %1006
        %1008 = vrot.lane.b32.xlu0 %v583, 112
        %v1009 = vpop.permute.xlu0 %1008
        %v1012 = vsel %vm587, %v1004, 0
        %1014 = vmatprep.subr.mxu0 0.0
        %1015 = vmatpush1.msra.mxu0 %v1009
        %1016 = vmatprep.subr.mxu0 0.0
        %1017 = vmatpush1.msra.mxu0 0.0
        %1018 = vmatprep.subr.mxu0 0.0
        %1019 = vmatpush1.msra.mxu0 0.0
        %1020 = vmatprep.subr.mxu0 0.0
        %1021 = vmatpush1.msra.mxu0 0.0
        %1022 = vmatprep.subr.mxu0 0.0
        %1023 = vmatpush1.msra.mxu0 0.0
        %1024 = vmatprep.subr.mxu0 0.0
        %1025 = vmatpush1.msra.mxu0 0.0
        %1026 = vmatprep.subr.mxu0 0.0
        %1027 = vmatpush1.msra.mxu0 0.0
        %1028 = vmatprep.subr.mxu0 0.0
        %1029 = vmatpush1.msra.mxu0 0.0
        %1030 = vmatprep.subr.mxu0 0.0
        %1031 = vmatpush1.msra.mxu0 0.0
        %1032 = vmatprep.subr.mxu0 0.0
        %1033 = vmatpush1.msra.mxu0 0.0
        %1034 = vmatprep.subr.mxu0 0.0
        %1035 = vmatpush1.msra.mxu0 0.0
        %1036 = vmatprep.subr.mxu0 0.0
        %1037 = vmatpush1.msra.mxu0 0.0
        %1038 = vmatprep.subr.mxu0 0.0
        %1039 = vmatpush1.msra.mxu0 0.0
        %1040 = vmatprep.subr.mxu0 0.0
        %1041 = vmatpush1.msra.mxu0 0.0
        %1042 = vmatprep.subr.mxu0 0.0
        %1043 = vmatpush1.msra.mxu0 0.0
        %1044 = vmatprep.subr.mxu0 0.0
        %1045 = vmatpush1.msra.mxu0 0.0
        %1046 = vmatprep.subr.mxu0 0.0
        %1047 = vmatpush1.msra.mxu0 0.0
        %1048 = vmatprep.subr.mxu0 0.0
        %1049 = vmatpush1.msra.mxu0 0.0
        %1050 = vmatprep.subr.mxu0 0.0
        %1051 = vmatpush1.msra.mxu0 0.0
        %1052 = vmatprep.subr.mxu0 0.0
        %1053 = vmatpush1.msra.mxu0 0.0
        %1054 = vmatprep.subr.mxu0 0.0
        %1055 = vmatpush1.msra.mxu0 0.0
        %1056 = vmatprep.subr.mxu0 0.0
        %1057 = vmatpush1.msra.mxu0 0.0
        %1058 = vmatprep.subr.mxu0 0.0
        %1059 = vmatpush1.msra.mxu0 0.0
        %1060 = vmatprep.subr.mxu0 0.0
        %1061 = vmatpush1.msra.mxu0 0.0
        %1062 = vmatprep.subr.mxu0 0.0
        %1063 = vmatpush1.msra.mxu0 0.0
        %1064 = vmatprep.subr.mxu0 0.0
        %1065 = vmatpush1.msra.mxu0 0.0
        %1066 = vmatprep.subr.mxu0 0.0
        %1067 = vmatpush1.msra.mxu0 0.0
        %1068 = vmatprep.subr.mxu0 0.0
        %1069 = vmatpush1.msra.mxu0 0.0
        %1070 = vmatprep.subr.mxu0 0.0
        %1071 = vmatpush1.msra.mxu0 0.0
        %1072 = vmatprep.subr.mxu0 0.0
        %1073 = vmatpush1.msra.mxu0 0.0
        %1074 = vmatprep.subr.mxu0 0.0
        %1075 = vmatpush1.msra.mxu0 0.0
        %1076 = vmatprep.subr.mxu0 0.0
        %1077 = vmatpush1.msra.mxu0 0.0
        %1078 = vmatprep.mubr.f32.mxu0 0.0
        %1079 = vmatmul.mubr.f32.gmra.mrb[0].mxu0 %v1012
        %v1080 = vpop.f32.mrb[0].mxu0
        %v1081 = vadd.f32 0.0, %v1080
        %v1082 = vpop.f32.mrb[0].mxu0
        %1083 = vdwg.mxu0
        %v1084 = vrcp.pop %v1007
        %v1085 = vmul.f32 %v1081, %v1084
        %1087 = vrot.lane.b32.xlu0 %v1085, 16
        %v1088 = vpop.permute.xlu0 %1087
        %vm1090 = vcmask 195712
        %1091 = vst.msk [vmem:[%s337] sm:$0xff] %vm1090, %v1088
        %1092 = vrot.lane.b32.xlu0 %v421, 104
        %v1093 = vpop.permute.xlu0 %1092
        %1094 = vrot.lane.b32.xlu0 %v586, 104
        %v1095 = vpop.permute.xlu0 %1094
        %v1096 = vsel %vm587, %v1093, 0
        %v1098 = vsel %vm587, %v1095, 0
        %1100 = vmatprep.subr.mxu0 0.0
        %1101 = vmatpush1.xpose.msra.mxu0 %v1098
        %1102 = vmatprep.subr.mxu0 0.0
        %1103 = vmatpush1.xpose.msra.mxu0 0.0
        %1104 = vmatprep.subr.mxu0 0.0
        %1105 = vmatpush1.xpose.msra.mxu0 0.0
        %1106 = vmatprep.subr.mxu0 0.0
        %1107 = vmatpush1.xpose.msra.mxu0 0.0
        %1108 = vmatprep.subr.mxu0 0.0
        %1109 = vmatpush1.xpose.msra.mxu0 0.0
        %1110 = vmatprep.subr.mxu0 0.0
        %1111 = vmatpush1.xpose.msra.mxu0 0.0
        %1112 = vmatprep.subr.mxu0 0.0
        %1113 = vmatpush1.xpose.msra.mxu0 0.0
        %1114 = vmatprep.subr.mxu0 0.0
        %1115 = vmatpush1.xpose.msra.mxu0 0.0
        %1116 = vmatprep.subr.mxu0 0.0
        %1117 = vmatpush1.xpose.msra.mxu0 0.0
        %1118 = vmatprep.subr.mxu0 0.0
        %1119 = vmatpush1.xpose.msra.mxu0 0.0
        %1120 = vmatprep.subr.mxu0 0.0
        %1121 = vmatpush1.xpose.msra.mxu0 0.0
        %1122 = vmatprep.subr.mxu0 0.0
        %1123 = vmatpush1.xpose.msra.mxu0 0.0
        %1124 = vmatprep.subr.mxu0 0.0
        %1125 = vmatpush1.xpose.msra.mxu0 0.0
        %1126 = vmatprep.subr.mxu0 0.0
        %1127 = vmatpush1.xpose.msra.mxu0 0.0
        %1128 = vmatprep.subr.mxu0 0.0
        %1129 = vmatpush1.xpose.msra.mxu0 0.0
        %1130 = vmatprep.subr.mxu0 0.0
        %1131 = vmatpush1.xpose.msra.mxu0 0.0
        %1132 = vmatprep.subr.mxu0 0.0
        %1133 = vmatpush1.xpose.msra.mxu0 0.0
        %1134 = vmatprep.subr.mxu0 0.0
        %1135 = vmatpush1.xpose.msra.mxu0 0.0
        %1136 = vmatprep.subr.mxu0 0.0
        %1137 = vmatpush1.xpose.msra.mxu0 0.0
        %1138 = vmatprep.subr.mxu0 0.0
        %1139 = vmatpush1.xpose.msra.mxu0 0.0
        %1140 = vmatprep.subr.mxu0 0.0
        %1141 = vmatpush1.xpose.msra.mxu0 0.0
        %1142 = vmatprep.subr.mxu0 0.0
        %1143 = vmatpush1.xpose.msra.mxu0 0.0
        %1144 = vmatprep.subr.mxu0 0.0
        %1145 = vmatpush1.xpose.msra.mxu0 0.0
        %1146 = vmatprep.subr.mxu0 0.0
        %1147 = vmatpush1.xpose.msra.mxu0 0.0
        %1148 = vmatprep.subr.mxu0 0.0
        %1149 = vmatpush1.xpose.msra.mxu0 0.0
        %1150 = vmatprep.subr.mxu0 0.0
        %1151 = vmatpush1.xpose.msra.mxu0 0.0
        %1152 = vmatprep.subr.mxu0 0.0
        %1153 = vmatpush1.xpose.msra.mxu0 0.0
        %1154 = vmatprep.subr.mxu0 0.0
        %1155 = vmatpush1.xpose.msra.mxu0 0.0
        %1156 = vmatprep.subr.mxu0 0.0
        %1157 = vmatpush1.xpose.msra.mxu0 0.0
        %1158 = vmatprep.subr.mxu0 0.0
        %1159 = vmatpush1.xpose.msra.mxu0 0.0
        %1160 = vmatprep.subr.mxu0 0.0
        %1161 = vmatpush1.xpose.msra.mxu0 0.0
        %1162 = vmatprep.subr.mxu0 0.0
        %1163 = vmatpush1.xpose.msra.mxu0 0.0
        %1164 = vmatprep.mubr.f32.mxu0 0.0
        %1165 = vmatmul.mubr.f32.gmra.mrb[0].mxu0 %v1096
        %v1166 = vpop.f32.mrb[0].mxu0
        %v1167 = vadd.f32 0.0, %v1166
        %v1168 = vpop.f32.mrb[0].mxu0
        %1169 = vdwg.mxu0
        %v1170 = vsel %vm587, %v1167, -inf
        %1171 = vmax.xlane.f32.xlu0 %v1170
        %v1172 = vpop.xlane.xlu0 %1171
        %v1173 = vsub.f32 %v1167, %v1172
        %v1174 = vmul.f32 %v1173, 1.442695
        %v1175 = vpow.pop %v1174
        %v1176 = vsel %vm587, %v1175, 0.0
        %1177 = vadd.xlane.f32.xlu0 %v1176
        %v1178 = vpop.xlane.xlu0 %1177
        %1179 = vrot.lane.b32.xlu0 %v583, 104
        %v1180 = vpop.permute.xlu0 %1179
        %v1183 = vsel %vm587, %v1175, 0
        %1185 = vmatprep.subr.mxu0 0.0
        %1186 = vmatpush1.msra.mxu0 %v1180
        %1187 = vmatprep.subr.mxu0 0.0
        %1188 = vmatpush1.msra.mxu0 0.0
        %1189 = vmatprep.subr.mxu0 0.0
        %1190 = vmatpush1.msra.mxu0 0.0
        %1191 = vmatprep.subr.mxu0 0.0
        %1192 = vmatpush1.msra.mxu0 0.0
        %1193 = vmatprep.subr.mxu0 0.0
        %1194 = vmatpush1.msra.mxu0 0.0
        %1195 = vmatprep.subr.mxu0 0.0
        %1196 = vmatpush1.msra.mxu0 0.0
        %1197 = vmatprep.subr.mxu0 0.0
        %1198 = vmatpush1.msra.mxu0 0.0
        %1199 = vmatprep.subr.mxu0 0.0
        %1200 = vmatpush1.msra.mxu0 0.0
        %1201 = vmatprep.subr.mxu0 0.0
        %1202 = vmatpush1.msra.mxu0 0.0
        %1203 = vmatprep.subr.mxu0 0.0
        %1204 = vmatpush1.msra.mxu0 0.0
        %1205 = vmatprep.subr.mxu0 0.0
        %1206 = vmatpush1.msra.mxu0 0.0
        %1207 = vmatprep.subr.mxu0 0.0
        %1208 = vmatpush1.msra.mxu0 0.0
        %1209 = vmatprep.subr.mxu0 0.0
        %1210 = vmatpush1.msra.mxu0 0.0
        %1211 = vmatprep.subr.mxu0 0.0
        %1212 = vmatpush1.msra.mxu0 0.0
        %1213 = vmatprep.subr.mxu0 0.0
        %1214 = vmatpush1.msra.mxu0 0.0
        %1215 = vmatprep.subr.mxu0 0.0
        %1216 = vmatpush1.msra.mxu0 0.0
        %1217 = vmatprep.subr.mxu0 0.0
        %1218 = vmatpush1.msra.mxu0 0.0
        %1219 = vmatprep.subr.mxu0 0.0
        %1220 = vmatpush1.msra.mxu0 0.0
        %1221 = vmatprep.subr.mxu0 0.0
        %1222 = vmatpush1.msra.mxu0 0.0
        %1223 = vmatprep.subr.mxu0 0.0
        %1224 = vmatpush1.msra.mxu0 0.0
        %1225 = vmatprep.subr.mxu0 0.0
        %1226 = vmatpush1.msra.mxu0 0.0
        %1227 = vmatprep.subr.mxu0 0.0
        %1228 = vmatpush1.msra.mxu0 0.0
        %1229 = vmatprep.subr.mxu0 0.0
        %1230 = vmatpush1.msra.mxu0 0.0
        %1231 = vmatprep.subr.mxu0 0.0
        %1232 = vmatpush1.msra.mxu0 0.0
        %1233 = vmatprep.subr.mxu0 0.0
        %1234 = vmatpush1.msra.mxu0 0.0
        %1235 = vmatprep.subr.mxu0 0.0
        %1236 = vmatpush1.msra.mxu0 0.0
        %1237 = vmatprep.subr.mxu0 0.0
        %1238 = vmatpush1.msra.mxu0 0.0
        %1239 = vmatprep.subr.mxu0 0.0
        %1240 = vmatpush1.msra.mxu0 0.0
        %1241 = vmatprep.subr.mxu0 0.0
        %1242 = vmatpush1.msra.mxu0 0.0
        %1243 = vmatprep.subr.mxu0 0.0
        %1244 = vmatpush1.msra.mxu0 0.0
        %1245 = vmatprep.subr.mxu0 0.0
        %1246 = vmatpush1.msra.mxu0 0.0
        %1247 = vmatprep.subr.mxu0 0.0
        %1248 = vmatpush1.msra.mxu0 0.0
        %1249 = vmatprep.mubr.f32.mxu0 0.0
        %1250 = vmatmul.mubr.f32.gmra.mrb[0].mxu0 %v1183
        %v1251 = vpop.f32.mrb[0].mxu0
        %v1252 = vadd.f32 0.0, %v1251
        %v1253 = vpop.f32.mrb[0].mxu0
        %1254 = vdwg.mxu0
        %v1255 = vrcp.pop %v1178
        %v1256 = vmul.f32 %v1252, %v1255
        %1258 = vrot.lane.b32.xlu0 %v1256, 24
        %v1259 = vpop.permute.xlu0 %1258
        %vm1261 = vcmask 261312
        %1262 = vst.msk [vmem:[%s337] sm:$0xff] %vm1261, %v1259
        %s1263 = sand.u32 %s186, 1
        %s1264 = scalar_lea.sflag [#allocation4], %s1263
        %s1265 = sand.u32 %s186, 1
        %s1266 = smul.addr %s1265, 8
        %s1267 = scalar_lea.vmem [#allocation10], %s1266
        // Predicated region
        $region65: #{tpu_custom_call.1} parent=47 // pred_check
          %p1268 = pneg %p196
        $region66: #{tpu_custom_call.1} parent=47 // pred_check_branch
          %1270 = sbr.rel (%p1268) target = $region68
        $region67: #{tpu_custom_call.1} parent=47 // pred_region
          %s1272 = ssub.s32 128, 128
          %1273 = vsyncadd %s1264, %s1272
          %s1274 = smul.addr %s26, 128
          %s1275 = scalar_lea.hbm %s7, %s1274
          %s1277 = sshll.u32 %s1267, 4
          %s1278 = int_to_ptr.vmem [resolvable:$true] %s1277
          %1280 = dma.vmem_to_hbm [thread:$0]  %s1278, 128, %s1275, %s1264
        $region68: #{tpu_custom_call.1} parent=47 // pred_fallthru
          _
      $region48: #{tpu_custom_call.1} parent=5 // pred_fallthru
        _
      %p1281 = scmp.le.s32.totalorder 2, %s21
      // Predicated region
      $region69: #{tpu_custom_call.1} parent=5 // pred_check
        %p1282 = pneg %p1281
      $region70: #{tpu_custom_call.1} parent=5 // pred_check_branch
        %1284 = sbr.rel (%p1282) target = $region72
      $region71: #{tpu_custom_call.1} parent=5 // pred_region
        %s1285 = ssub.s32 %s21, 2
        // Predicated region
        $region73: #{tpu_custom_call.1} parent=71 // pred_check
          %p1286 = pneg %p202
        $region74: #{tpu_custom_call.1} parent=71 // pred_check_branch
          %1288 = sbr.rel (%p1286) target = $region76
        $region75: #{tpu_custom_call.1} parent=71 // pred_region
          %s1289 = sand.u32 %s187, 1
          %s1290 = scalar_lea.sflag [#allocation4], %s1289
          %s1291 = sand.u32 %s187, 1
          %s1292 = smul.addr %s1291, 8
          %s1293 = scalar_lea.vmem [#allocation10], %s1292
          %1294 = dma.done %s1290, 128
        $region76: #{tpu_custom_call.1} parent=71 // pred_fallthru
          _
      $region72: #{tpu_custom_call.1} parent=5 // pred_fallthru
        _
    $region6: #{tpu_custom_call.1} parent=1 // loop_footer
      %s25 = sadd.s32 1, %s21
    $region7: #{tpu_custom_call.1} parent=1 // loop_footer_branch
      %20 = sbr.rel target = $region3
    $region8: #{tpu_custom_call.1} parent=1 // loop_exit
      _
    %1295 = vsyncpa [#allocation3], 1
    %s1296 = scalar_lea.sflag [#allocation3], 1
    %1297 = vsyncpa %s1296, 1
    %1298 = vsyncpa [#allocation6], 1
    %1299 = vsyncpa [#allocation9], 1
    %1300 = vsyncpa [#allocation4], 1
    %s1301 = scalar_lea.sflag [#allocation4], 1
    %1302 = vsyncpa %s1301, 1

</llo_original>
